<compile_context>
chip_gen: v7x
topology: tpu7x:2x2x1
jax: 0.10.0
libtpu: 0.0.40
codegen_flags: <defaults>
</compile_context>

<pallas_src>
import functools
import math

import jax
import jax.numpy as jnp
from jax import lax
from jax.experimental import pallas as pl
from jax.experimental.pallas import tpu as pltpu

_MASK_VALUE = -1e30  # finite "minus infinity": keeps the online softmax NaN-free


def _flash_sdpa_kernel(flags_ref, lastj_ref,            # scalar-prefetch (SMEM)
                       q_ref, k_ref, v_ref, mask_ref,   # inputs (VMEM tiles)
                       o_ref,                           # output
                       q_sc, m_sc, l_sc, acc_sc,        # scratch
                       *, scale, mask_batched):
    """One (batch, q-tile, kv-tile) grid step of flash attention."""
    b = pl.program_id(0)
    i = pl.program_id(1)
    kv = pl.program_id(2)
    nq = pl.num_programs(1)
    nk = pl.num_programs(2)
    mb = b if mask_batched else 0              # static Python branch

    @pl.when(kv == 0)
    def _init():
        # Cache the scaled, bf16 q tile once per (b, i); the q block is resident
        # across the whole kv loop, so no per-step rescale / recast.
        q_sc[...] = (q_ref[0] * scale).astype(jnp.bfloat16)
        m_sc[...] = jnp.full_like(m_sc, -jnp.inf)
        l_sc[...] = jnp.zeros_like(l_sc)
        acc_sc[...] = jnp.zeros_like(acc_sc)

    # Per-tile liveness flag (any unmasked entry in this (i, kv) tile).
    flat = (mb * nq + i) * nk + kv
    tile_live = flags_ref[flat] != 0

    @pl.when(tile_live)
    def _compute():
        q = q_sc[...]                                     # (tq, D) bf16, pre-scaled
        k = k_ref[0].astype(jnp.bfloat16)                 # (tk, D) bf16
        v = v_ref[0].astype(jnp.bfloat16)                 # (tk, D) bf16
        m = mask_ref[0]                                   # (tq, tk) int8, nonzero == masked

        # q @ k^T without materializing k.T: contract the last dim of both.
        s = lax.dot_general(q, k, (((1,), (1,)), ((), ())),
                            preferred_element_type=jnp.float32)   # (tq, tk) f32
        s = jnp.where(m != 0, _MASK_VALUE, s)             # masked_fill

        # Online softmax update (all statistics in f32).
        m_prev = m_sc[...]
        m_new = jnp.maximum(m_prev, jnp.max(s, axis=-1, keepdims=True))
        alpha = jnp.exp(m_prev - m_new)
        p = jnp.exp(s - m_new)                            # un-normalized probabilities
        l_sc[...] = alpha * l_sc[...] + jnp.sum(p, axis=-1, keepdims=True)
        acc_sc[...] = alpha * acc_sc[...] + jnp.dot(
            p.astype(jnp.bfloat16), v, preferred_element_type=jnp.float32)
        m_sc[...] = m_new

    # Deferred normalization, once per q tile, on the last kv step.
    @pl.when(kv == nk - 1)
    def _finalize():
        l = l_sc[...]
        # Row blocks whose every kv tile is dead end with l == 0: emit 0, not NaN.
        l = jnp.where(l == 0.0, 1.0, l)
        o_ref[0] = (acc_sc[...] * pl.reciprocal(l, approx=False)).astype(o_ref.dtype)


def scaled_dot_product_attn(q, k, v, mask, *, block_q=128, block_k=256):
    """q, k, v: [B, S, D] float32.

    mask: bool, True = masked out; shape (S, S), (1, S, S) or (B, S, S).
    """
    B, S, D = q.shape
    scale = 1.0 / math.sqrt(D)                 # d_model of the module

    if mask.ndim == 2:
        mask = mask[None]
    Bm = mask.shape[0]
    if Bm not in (1, B):
        raise ValueError(f"mask batch dim must be 1 or {B}, got {Bm}")
    mask_batched = Bm == B

    tq = min(block_q, S)
    tk = min(block_k, S)
    if S % tq or S % tk:
        raise ValueError(f"S={S} must be divisible by tile sizes ({tq}, {tk})")
    nq, nk = S // tq, S // tk

    mask_i8 = mask.astype(jnp.int8)            # 4x less HBM traffic than int32

    # Scalar-prefetch metadata: tile liveness + last live kv tile per q row block.
    m5 = mask.reshape(Bm, nq, tq, nk, tk)
    tile_live = jnp.any(jnp.logical_not(m5), axis=(2, 4))            # (Bm, nq, nk)
    flags = tile_live.astype(jnp.int32).reshape(-1)                   # (Bm*nq*nk,)
    j_idx = jnp.arange(nk, dtype=jnp.int32)
    last_j = jnp.max(jnp.where(tile_live, j_idx[None, None, :], -1), axis=-1)
    last_j = jnp.maximum(last_j, 0).astype(jnp.int32).reshape(-1)      # (Bm*nq,)

    mb_of = (lambda b: b) if mask_batched else (lambda b: 0)

    def q_map(b, i, j, flags_r, lastj_r):
        return (b, i, 0)

    def kv_map(b, i, j, flags_r, lastj_r):
        # Clamp dead trailing kv tiles onto the last live one: the repeated block
        # index is deduped by the pipeline, so dead tiles cost no HBM traffic.
        jj = jnp.minimum(j, lastj_r[mb_of(b) * nq + i])
        return (b, jj, 0)

    def mask_map(b, i, j, flags_r, lastj_r):
        jj = jnp.minimum(j, lastj_r[mb_of(b) * nq + i])
        return (mb_of(b), i, jj)

    def out_map(b, i, j, flags_r, lastj_r):
        return (b, i, 0)

    grid_spec = pltpu.PrefetchScalarGridSpec(
        num_scalar_prefetch=2,
        grid=(B, nq, nk),                      # kv reduction axis innermost
        in_specs=[
            pl.BlockSpec((1, tq, D), q_map),       # q  (full-extent head dim)
            pl.BlockSpec((1, tk, D), kv_map),      # k
            pl.BlockSpec((1, tk, D), kv_map),      # v
            pl.BlockSpec((1, tq, tk), mask_map),   # mask (shared across batch if Bm==1)
        ],
        out_specs=pl.BlockSpec((1, tq, D), out_map),
        scratch_shapes=[
            pltpu.VMEM((tq, D), jnp.bfloat16),  # scaled bf16 q cache
            pltpu.VMEM((tq, 1), jnp.float32),   # running max
            pltpu.VMEM((tq, 1), jnp.float32),   # running denominator
            pltpu.VMEM((tq, D), jnp.float32),   # output accumulator
        ],
    )

    cost = pl.CostEstimate(
        flops=int(4 * B * S * S * D),
        transcendentals=int(B * S * S),
        bytes_accessed=int(4 * B * S * D * (2 + 2 * nq) + B * S * S),
    )

    # TODO(synk): optionally ship q/k/v as bfloat16 from HBM (halves the dominant
    # K/V DMA bytes) if the caller's accuracy budget allows; and set
    # pipeline_mode=pl.Buffered(3) on the k/v specs if DMA shows up exposed.
    out = pl.pallas_call(
        functools.partial(_flash_sdpa_kernel, scale=scale,
                          mask_batched=mask_batched),
        out_shape=jax.ShapeDtypeStruct((B, S, D), q.dtype),
        grid_spec=grid_spec,
        compiler_params=pltpu.CompilerParams(
            dimension_semantics=("parallel", "parallel", "arbitrary"),
        ),
        cost_estimate=cost,
    )(flags, last_j, q, k, v, mask_i8)

    return out


def _reference(q, k, v, mask):
    div = math.sqrt(q.shape[-1])
    s = jnp.einsum("bqd,bkd->bqk", q, k) / div
    s = jnp.where(mask, -jnp.inf, s)
    p = jax.nn.softmax(s, axis=-1)
    return jnp.einsum("bqk,bkd->bqd", p, v)


if __name__ == "__main__":
    # Small, but large enough (S > tile) to exercise tiling, online softmax,
    # dead-tile skipping and both shared / per-batch mask paths.
    B, S, D = 2, 256, 32
    key = jax.random.PRNGKey(0)
    kq, kk, kv_ = jax.random.split(key, 3)

    q = jax.random.normal(kq, (B, S, D), dtype=jnp.float32)
    k = jax.random.normal(kk, (B, S, D), dtype=jnp.float32)
    v = jax.random.normal(kv_, (B, S, D), dtype=jnp.float32)

    # Causal mask (True = masked out); no fully-masked rows.
    causal = jnp.triu(jnp.ones((S, S), dtype=jnp.bool_), k=1)
    mask_shared = causal[None]                               # (1, S, S), not replicated
    mask_batched = jnp.broadcast_to(causal, (B, S, S))       # per-batch path

    ref = _reference(q, k, v, mask_shared)

    # Default blocks (tq=128, tk=256): MXU-filling tiles for v6e/v7x.
    out_a = scaled_dot_product_attn(q, k, v, mask_shared)
    # 128x128 blocks with a per-batch mask: exercises multi-kv-step online
    # softmax, dead-tile skipping and the clamped k/v/mask index_maps.
    out_b = scaled_dot_product_attn(q, k, v, mask_batched, block_q=128, block_k=128)
    jax.block_until_ready((out_a, out_b))

    # Tolerance covers the bf16 MXU matmuls (all accumulation stays f32).
    assert jnp.allclose(out_a, ref, atol=2e-2, rtol=2e-2), "mismatch (default blocks)"
    assert jnp.allclose(out_b, ref, atol=2e-2, rtol=2e-2), "mismatch (128/128 blocks)"

    print("KERNEL_OK")
</pallas_src>

<mosaic_0001>
module attributes {stable_mosaic.version = 11 : i64} {
  func.func @_flash_sdpa_kernel(%arg0: i32, %arg1: i32, %arg2: i32, %arg3: memref<2xi32, #tpu.memory_space<smem>>, %arg4: memref<2xi32, #tpu.memory_space<smem>>, %arg5: memref<1x128x32xf32, #tpu.memory_space<vmem>>, %arg6: memref<1x256x32xf32, #tpu.memory_space<vmem>>, %arg7: memref<1x256x32xf32, #tpu.memory_space<vmem>>, %arg8: memref<1x128x256xi8, #tpu.memory_space<vmem>>, %arg9: memref<1x128x32xf32, #tpu.memory_space<vmem>>, %arg10: memref<128x32xbf16, #tpu.memory_space<vmem>>, %arg11: memref<128x1xf32, #tpu.memory_space<vmem>>, %arg12: memref<128x1xf32, #tpu.memory_space<vmem>>, %arg13: memref<128x32xf32, #tpu.memory_space<vmem>>) attributes {dimension_semantics = [#tpu.dimension_semantics<parallel>, #tpu.dimension_semantics<parallel>, #tpu.dimension_semantics<arbitrary>], iteration_bounds = array<i64: 2, 2, 1>, scalar_prefetch = 2 : i64, scratch_operands = 4 : i64, tpu.core_type = #tpu.core_type<tc>, window_params = [{transform_indices = @transform_0, window_bounds = array<i64: 1, 128, 32>}, {transform_indices = @transform_1, window_bounds = array<i64: 1, 256, 32>}, {transform_indices = @transform_2, window_bounds = array<i64: 1, 256, 32>}, {transform_indices = @transform_3, window_bounds = array<i64: 1, 128, 256>}, {transform_indices = @transform_4, window_bounds = array<i64: 1, 128, 32>}]} {
    %c0_i32 = arith.constant 0 : i32
    %0 = arith.cmpi eq, %arg2, %c0_i32 : i32
    %1 = arith.extui %0 : i1 to i32
    %c0_i32_0 = arith.constant 0 : i32
    %2 = arith.cmpi ne, %1, %c0_i32_0 : i32
    scf.if %2 {
      %c0 = arith.constant 0 : index
      %c0_6 = arith.constant 0 : index
      %c0_7 = arith.constant 0 : index
      %14 = vector.load %arg5[%c0, %c0_6, %c0_7] : memref<1x128x32xf32, #tpu.memory_space<vmem>>, vector<1x128x32xf32>
      %15 = vector.shape_cast %14 : vector<1x128x32xf32> to vector<128x32xf32>
      %cst = arith.constant 0.176776692 : f32
      %16 = vector.broadcast %cst : f32 to vector<128x32xf32>
      %17 = arith.mulf %15, %16 : vector<128x32xf32>
      %18 = arith.truncf %17 : vector<128x32xf32> to vector<128x32xbf16>
      %c0_8 = arith.constant 0 : index
      %c0_9 = arith.constant 0 : index
      %19 = vector.load %arg10[%c0_8, %c0_9] : memref<128x32xbf16, #tpu.memory_space<vmem>>, vector<128x32xbf16>
      tpu.vector_store %arg10[%c0_8, %c0_9], %18 {strides = array<i32>} : memref<128x32xbf16, #tpu.memory_space<vmem>>, vector<128x32xbf16>,
      %cst_10 = arith.constant 0xFF800000 : f32
      %20 = vector.broadcast %cst_10 : f32 to vector<128x1xf32>
      %c0_11 = arith.constant 0 : index
      %c0_12 = arith.constant 0 : index
      %21 = vector.load %arg11[%c0_11, %c0_12] : memref<128x1xf32, #tpu.memory_space<vmem>>, vector<128x1xf32>
      tpu.vector_store %arg11[%c0_11, %c0_12], %20 {strides = array<i32>} : memref<128x1xf32, #tpu.memory_space<vmem>>, vector<128x1xf32>,
      %cst_13 = arith.constant 0.000000e+00 : f32
      %22 = vector.broadcast %cst_13 : f32 to vector<128x1xf32>
      %c0_14 = arith.constant 0 : index
      %c0_15 = arith.constant 0 : index
      %23 = vector.load %arg12[%c0_14, %c0_15] : memref<128x1xf32, #tpu.memory_space<vmem>>, vector<128x1xf32>
      tpu.vector_store %arg12[%c0_14, %c0_15], %22 {strides = array<i32>} : memref<128x1xf32, #tpu.memory_space<vmem>>, vector<128x1xf32>,
      %cst_16 = arith.constant 0.000000e+00 : f32
      %24 = vector.broadcast %cst_16 : f32 to vector<128x32xf32>
      %c0_17 = arith.constant 0 : index
      %c0_18 = arith.constant 0 : index
      %25 = vector.load %arg13[%c0_17, %c0_18] : memref<128x32xf32, #tpu.memory_space<vmem>>, vector<128x32xf32>
      tpu.vector_store %arg13[%c0_17, %c0_18], %24 {strides = array<i32>} : memref<128x32xf32, #tpu.memory_space<vmem>>, vector<128x32xf32>,
    } else {
    }
    %c0_i32_1 = arith.constant 0 : i32
    %3 = arith.addi %c0_i32_1, %arg1 : i32
    %c1_i32 = arith.constant 1 : i32
    %4 = arith.muli %3, %c1_i32 : i32
    %5 = arith.addi %4, %arg2 : i32
    %6 = arith.index_cast %5 : i32 to index
    %7 = memref.load %arg3[%6] : memref<2xi32, #tpu.memory_space<smem>>
    %c0_i32_2 = arith.constant 0 : i32
    %8 = arith.cmpi ne, %7, %c0_i32_2 : i32
    %9 = arith.extui %8 : i1 to i32
    %c0_i32_3 = arith.constant 0 : i32
    %10 = arith.cmpi ne, %9, %c0_i32_3 : i32
    scf.if %10 {
      %c0 = arith.constant 0 : index
      %c0_6 = arith.constant 0 : index
      %14 = vector.load %arg10[%c0, %c0_6] : memref<128x32xbf16, #tpu.memory_space<vmem>>, vector<128x32xbf16>
      %c0_7 = arith.constant 0 : index
      %c0_8 = arith.constant 0 : index
      %c0_9 = arith.constant 0 : index
      %15 = vector.load %arg6[%c0_7, %c0_8, %c0_9] : memref<1x256x32xf32, #tpu.memory_space<vmem>>, vector<1x256x32xf32>
      %16 = vector.shape_cast %15 : vector<1x256x32xf32> to vector<256x32xf32>
      %17 = arith.truncf %16 : vector<256x32xf32> to vector<256x32xbf16>
      %c0_10 = arith.constant 0 : index
      %c0_11 = arith.constant 0 : index
      %c0_12 = arith.constant 0 : index
      %18 = vector.load %arg7[%c0_10, %c0_11, %c0_12] : memref<1x256x32xf32, #tpu.memory_space<vmem>>, vector<1x256x32xf32>
      %19 = vector.shape_cast %18 : vector<1x256x32xf32> to vector<256x32xf32>
      %20 = arith.truncf %19 : vector<256x32xf32> to vector<256x32xbf16>
      %c0_13 = arith.constant 0 : index
      %c0_14 = arith.constant 0 : index
      %c0_15 = arith.constant 0 : index
      %21 = vector.load %arg8[%c0_13, %c0_14, %c0_15] : memref<1x128x256xi8, #tpu.memory_space<vmem>>, vector<1x128x256xi8>
      %22 = vector.shape_cast %21 : vector<1x128x256xi8> to vector<128x256xi8>
      %cst = arith.constant dense<0.000000e+00> : vector<128x256xf32>
      %23 = tpu.matmul %14, %17, %cst {dimension_numbers = #tpu.dot_dimension_numbers<[1], [1], [0], [0], [0, 0, 1, 0], [], []>} : vector<128x32xbf16>, vector<256x32xbf16>, vector<128x256xf32> -> vector<128x256xf32>
      %c0_i8 = arith.constant 0 : i8
      %24 = vector.broadcast %c0_i8 : i8 to vector<128x256xi8>
      %25 = arith.cmpi ne, %22, %24 : vector<128x256xi8>
      %cst_16 = arith.constant -1.000000e+30 : f32
      %26 = vector.broadcast %cst_16 : f32 to vector<128x256xf32>
      %27 = arith.select %25, %26, %23 : vector<128x256xi1>, vector<128x256xf32>
      %c0_17 = arith.constant 0 : index
      %c0_18 = arith.constant 0 : index
      %28 = vector.load %arg11[%c0_17, %c0_18] : memref<128x1xf32, #tpu.memory_space<vmem>>, vector<128x1xf32>
      %cst_19 = arith.constant dense<0xFF800000> : vector<128xf32>
      %29 = vector.multi_reduction <maximumf>, %27, %cst_19 [1] : vector<128x256xf32> to vector<128xf32>
      %30 = vector.shape_cast %29 : vector<128xf32> to vector<128x1xf32>
      %31 = arith.maximumf %28, %30 : vector<128x1xf32>
      %32 = arith.subf %28, %31 : vector<128x1xf32>
      %33 = math.exp %32 : vector<128x1xf32>
      %34 = vector.broadcast %31 : vector<128x1xf32> to vector<128x256xf32>
      %35 = arith.subf %27, %34 : vector<128x256xf32>
      %36 = math.exp %35 : vector<128x256xf32>
      %c0_20 = arith.constant 0 : index
      %c0_21 = arith.constant 0 : index
      %37 = vector.load %arg12[%c0_20, %c0_21] : memref<128x1xf32, #tpu.memory_space<vmem>>, vector<128x1xf32>
      %38 = arith.mulf %33, %37 : vector<128x1xf32>
      %cst_22 = arith.constant dense<0.000000e+00> : vector<128xf32>
      %39 = vector.multi_reduction <add>, %36, %cst_22 [1] : vector<128x256xf32> to vector<128xf32>
      %40 = vector.shape_cast %39 : vector<128xf32> to vector<128x1xf32>
      %41 = arith.addf %38, %40 : vector<128x1xf32>
      %c0_23 = arith.constant 0 : index
      %c0_24 = arith.constant 0 : index
      %42 = vector.load %arg12[%c0_23, %c0_24] : memref<128x1xf32, #tpu.memory_space<vmem>>, vector<128x1xf32>
      tpu.vector_store %arg12[%c0_23, %c0_24], %41 {strides = array<i32>} : memref<128x1xf32, #tpu.memory_space<vmem>>, vector<128x1xf32>,
      %c0_25 = arith.constant 0 : index
      %c0_26 = arith.constant 0 : index
      %43 = vector.load %arg13[%c0_25, %c0_26] : memref<128x32xf32, #tpu.memory_space<vmem>>, vector<128x32xf32>
      %44 = vector.broadcast %33 : vector<128x1xf32> to vector<128x32xf32>
      %45 = arith.mulf %44, %43 : vector<128x32xf32>
      %46 = arith.truncf %36 : vector<128x256xf32> to vector<128x256xbf16>
      %cst_27 = arith.constant dense<0.000000e+00> : vector<128x32xf32>
      %47 = tpu.matmul %46, %20, %cst_27 {dimension_numbers = #tpu.dot_dimension_numbers<[1], [0], [0], [1], [0, 0, 1, 1], [], []>} : vector<128x256xbf16>, vector<256x32xbf16>, vector<128x32xf32> -> vector<128x32xf32>
      %48 = arith.addf %45, %47 : vector<128x32xf32>
      %c0_28 = arith.constant 0 : index
      %c0_29 = arith.constant 0 : index
      %49 = vector.load %arg13[%c0_28, %c0_29] : memref<128x32xf32, #tpu.memory_space<vmem>>, vector<128x32xf32>
      tpu.vector_store %arg13[%c0_28, %c0_29], %48 {strides = array<i32>} : memref<128x32xf32, #tpu.memory_space<vmem>>, vector<128x32xf32>,
      %c0_30 = arith.constant 0 : index
      %c0_31 = arith.constant 0 : index
      %50 = vector.load %arg11[%c0_30, %c0_31] : memref<128x1xf32, #tpu.memory_space<vmem>>, vector<128x1xf32>
      tpu.vector_store %arg11[%c0_30, %c0_31], %31 {strides = array<i32>} : memref<128x1xf32, #tpu.memory_space<vmem>>, vector<128x1xf32>,
    } else {
    }
    %c0_i32_4 = arith.constant 0 : i32
    %11 = arith.cmpi eq, %arg2, %c0_i32_4 : i32
    %12 = arith.extui %11 : i1 to i32
    %c0_i32_5 = arith.constant 0 : i32
    %13 = arith.cmpi ne, %12, %c0_i32_5 : i32
    scf.if %13 {
      %c0 = arith.constant 0 : index
      %c0_6 = arith.constant 0 : index
      %14 = vector.load %arg12[%c0, %c0_6] : memref<128x1xf32, #tpu.memory_space<vmem>>, vector<128x1xf32>
      %cst = arith.constant 0.000000e+00 : f32
      %15 = vector.broadcast %cst : f32 to vector<128x1xf32>
      %16 = arith.cmpf oeq, %14, %15 : vector<128x1xf32>
      %cst_7 = arith.constant 1.000000e+00 : f32
      %17 = vector.broadcast %cst_7 : f32 to vector<128x1xf32>
      %18 = arith.select %16, %17, %14 : vector<128x1xi1>, vector<128x1xf32>
      %c0_8 = arith.constant 0 : index
      %c0_9 = arith.constant 0 : index
      %19 = vector.load %arg13[%c0_8, %c0_9] : memref<128x32xf32, #tpu.memory_space<vmem>>, vector<128x32xf32>
      %20 = tpu.reciprocal %18 : vector<128x1xf32> -> vector<128x1xf32>
      %21 = vector.broadcast %20 : vector<128x1xf32> to vector<128x32xf32>
      %22 = arith.mulf %19, %21 : vector<128x32xf32>
      %c0_10 = arith.constant 0 : index
      %c0_11 = arith.constant 0 : index
      %c0_12 = arith.constant 0 : index
      %23 = vector.load %arg9[%c0_10, %c0_11, %c0_12] : memref<1x128x32xf32, #tpu.memory_space<vmem>>, vector<1x128x32xf32>
      %24 = vector.shape_cast %23 : vector<1x128x32xf32> to vector<128x32xf32>
      %25 = vector.shape_cast %22 : vector<128x32xf32> to vector<1x128x32xf32>
      tpu.vector_store %arg9[%c0_10, %c0_11, %c0_12], %25 {strides = array<i32>} : memref<1x128x32xf32, #tpu.memory_space<vmem>>, vector<1x128x32xf32>,
    } else {
    }
    return
  }
  func.func @transform_0(%arg0: i32, %arg1: i32, %arg2: i32, %arg3: memref<2xi32, #tpu.memory_space<smem>>, %arg4: memref<2xi32, #tpu.memory_space<smem>>) -> (i32, i32, i32) {
    %c0_i32 = arith.constant 0 : i32
    %c0_i32_0 = arith.constant 0 : i32
    return %arg0, %arg1, %c0_i32 : i32, i32, i32
  }
  func.func @transform_1(%arg0: i32, %arg1: i32, %arg2: i32, %arg3: memref<2xi32, #tpu.memory_space<smem>>, %arg4: memref<2xi32, #tpu.memory_space<smem>>) -> (i32, i32, i32) {
    %c0_i32 = arith.constant 0 : i32
    %0 = arith.addi %c0_i32, %arg1 : i32
    %1 = arith.index_cast %0 : i32 to index
    %2 = memref.load %arg4[%1] : memref<2xi32, #tpu.memory_space<smem>>
    %3 = arith.minsi %arg2, %2 : i32
    %c0_i32_0 = arith.constant 0 : i32
    %c0_i32_1 = arith.constant 0 : i32
    return %arg0, %3, %c0_i32_0 : i32, i32, i32
  }
  func.func @transform_2(%arg0: i32, %arg1: i32, %arg2: i32, %arg3: memref<2xi32, #tpu.memory_space<smem>>, %arg4: memref<2xi32, #tpu.memory_space<smem>>) -> (i32, i32, i32) {
    %c0_i32 = arith.constant 0 : i32
    %0 = arith.addi %c0_i32, %arg1 : i32
    %1 = arith.index_cast %0 : i32 to index
    %2 = memref.load %arg4[%1] : memref<2xi32, #tpu.memory_space<smem>>
    %3 = arith.minsi %arg2, %2 : i32
    %c0_i32_0 = arith.constant 0 : i32
    %c0_i32_1 = arith.constant 0 : i32
    return %arg0, %3, %c0_i32_0 : i32, i32, i32
  }
  func.func @transform_3(%arg0: i32, %arg1: i32, %arg2: i32, %arg3: memref<2xi32, #tpu.memory_space<smem>>, %arg4: memref<2xi32, #tpu.memory_space<smem>>) -> (i32, i32, i32) {
    %c0_i32 = arith.constant 0 : i32
    %0 = arith.addi %c0_i32, %arg1 : i32
    %1 = arith.index_cast %0 : i32 to index
    %2 = memref.load %arg4[%1] : memref<2xi32, #tpu.memory_space<smem>>
    %3 = arith.minsi %arg2, %2 : i32
    %c0_i32_0 = arith.constant 0 : i32
    %c0_i32_1 = arith.constant 0 : i32
    return %c0_i32_0, %arg1, %3 : i32, i32, i32
  }
  func.func @transform_4(%arg0: i32, %arg1: i32, %arg2: i32, %arg3: memref<2xi32, #tpu.memory_space<smem>>, %arg4: memref<2xi32, #tpu.memory_space<smem>>) -> (i32, i32, i32) {
    %c0_i32 = arith.constant 0 : i32
    %c0_i32_0 = arith.constant 0 : i32
    return %arg0, %arg1, %c0_i32 : i32, i32, i32
  }
}

</mosaic_0001>

<llo_original>
// kernel: tpu_custom_call.1
$region0: #{tpu_custom_call.1}
  #allocation0 [shape = 'u32[]', space=smem, size = 0x4, offset = 0x4, fixed_abs, tag = 'smem constant byte address 0x4 - core index']
  #allocation1 [shape = 'u32[144,128]{1,0:T(1,128)}', space=vmem, size = 0x12000, scoped, tag = 'internal scratch']
  #allocation2 [shape = 'bf16[128,32]{1,0:T(16,128)(2,1)}', space=vmem, size = 0x8000, scoped, tag = 'scratch operand']
  #allocation3 [shape = 'f32[128,1]{1,0:T(8,128)}', space=vmem, size = 0x10000, scoped, tag = 'scratch operand']
  #allocation4 [shape = 'f32[128,1]{1,0:T(8,128)}', space=vmem, size = 0x10000, scoped, tag = 'scratch operand']
  #allocation5 [shape = 'f32[128,32]{1,0:T(8,128)}', space=vmem, size = 0x10000, scoped, tag = 'scratch operand']
  #allocation6 [shape = 's32[1]{0}', space=sflag, size = 0x4, scoped, tag = 'scoped memory for tpu_custom_call.1']
  #allocation7 [shape = 'u8[512]{0}', space=smem, size = 0x200, scoped, tag = 'prefetched SMEM operand 0']
  #allocation8 [shape = 'u8[512]{0}', space=smem, size = 0x200, scoped, tag = 'prefetched SMEM operand 1']
  %s0 = inlined_call_operand.vmem [shape: s32[2], index: 0, kind: input, shape index: {}]
  %s1 = inlined_call_operand.vmem [shape: s32[2], index: 1, kind: input, shape index: {}]
  %s2 = inlined_call_operand.vmem [shape: f32[2,256,32], index: 2, kind: input, shape index: {}]
  %s3 = inlined_call_operand.vmem [shape: f32[2,256,32], index: 3, kind: input, shape index: {}]
  %s4 = inlined_call_operand.vmem [shape: f32[2,256,32], index: 4, kind: input, shape index: {}]
  %s5 = inlined_call_operand.vmem [shape: s8[1,256,256], index: 5, kind: input, shape index: {}]
  %s6 = inlined_call_operand.vmem [shape: f32[2,256,32], index: 6, kind: output, shape index: {}]
  %s7 = sld [smem:[#allocation0]]
  $region61: #{tpu_custom_call.1} parent=0
    _
  %s9 = ssub.s32 1, %s7
  %s10 = scalar_select 0, %s9, %s7
  %s11 = sshll.u32 %s0, 4
  %s12 = int_to_ptr.vmem [resolvable:$true] %s11
  %14 = dma.vmem_to_smem %s12, 16, [#allocation7], [#allocation6]
  %s15 = sshll.u32 %s1, 4
  %s16 = int_to_ptr.vmem [resolvable:$true] %s15
  %18 = dma.vmem_to_smem %s16, 16, [#allocation8], [#allocation6]
  %19 = dma.done [#allocation6], 32
  %20 = sfence
  loop: start=0, step=1, limit=6
  $region2: #{tpu_custom_call.1} parent=0 // loop_pre_header
    _
  $region3: #{tpu_custom_call.1} parent=0 // loop_header
    %s22 = sphi 0, %s26
    %p23 = scmp.ge.s32.totalorder %s22, 6
    %s29 = sphi 0, %s48
    %s30 = sphi 0, %s44
    %s31 = sphi 0, %s40
    %s32 = sphi 0, %s29
    %s33 = sphi 0, %s30
    %s34 = sphi 0, %s31
    %s35 = sphi 0, %s32
    %s36 = sphi 0, %s33
    %s37 = sphi 0, %s34
    %s53 = sphi 0, %s55
    %s56 = sphi 0, %s53
    %s57 = sphi 0, %s56
    %s73 = sphi 0, %s57
    %s87 = sphi 0, %s89
    %s90 = sphi 0, %s87
    %s91 = sphi 0, %s90
    %s107 = sphi 0, %s91
    %s121 = sphi 0, %s123
    %s124 = sphi 0, %s121
    %s125 = sphi 0, %s124
    %s141 = sphi 0, %s125
    %s155 = sphi 0, %s157
    %s158 = sphi 0, %s155
    %s159 = sphi 0, %s158
    %s175 = sphi 0, %s159
    %s183 = sphi 0, %s185
    %s186 = sphi 0, %s183
    %s187 = sphi 0, %s186
    %s203 = sphi 0, %s187
  $region4: #{tpu_custom_call.1} parent=0 // loop_header_branch
    %25 = sbr.rel (%p23) target = $region8
  $region5: #{tpu_custom_call.1} parent=0 // loop_body
    %s27 = ssub.s32 %s22, 1
    %s28 = ssub.s32 %s22, 2
    %s38 = sadd.s32 1, %s31
    %p39 = scmp.ge.s32.totalorder %s38, 1
    %s40 = scalar_select %p39, 0, %s38
    %s41 = sadd.s32 1, %s30
    %s42 = scalar_select %p39, %s41, %s30
    %p43 = scmp.ge.s32.totalorder %s42, 2
    %s44 = scalar_select %p43, 0, %s42
    %s45 = sadd.s32 1, %s29
    %s46 = scalar_select %p43, %s45, %s29
    %p47 = scmp.ge.s32.totalorder %s46, 2
    %s48 = scalar_select %p47, 0, %s46
    %s49 = ssub.s32 %s29, %s48
    %s50 = ssub.s32 %s30, %s44
    %s51 = sor.u32 %s49, %s50
    %p52 = scmp.eq.s32.totalorder %s51, 0
    %s54 = sadd.s32 %s53, 1
    %s55 = scalar_select %p52, %s53, %s54
    %p58 = pneg %p52
    %p59 = scmp.eq.s32.totalorder %s22, 3
    %p60 = por %p58, %p59
    %p61 = scmp.ne.s32.totalorder %s53, %s56
    %p62 = scmp.eq.s32.totalorder %s22, 0
    %p63 = por %p61, %p62
    %p64 = scmp.ne.s32.totalorder %s53, %s56
    %p65 = scmp.eq.s32.totalorder %s27, 3
    %p66 = por %p64, %p65
    %p67 = scmp.ne.s32.totalorder %s56, %s57
    %p68 = scmp.eq.s32.totalorder %s27, 0
    %p69 = por %p67, %p68
    %p70 = scmp.ne.s32.totalorder %s56, %s57
    %p71 = scmp.eq.s32.totalorder %s28, 3
    %p72 = por %p70, %p71
    %p74 = scmp.ne.s32.totalorder %s57, %s73
    %p75 = scmp.eq.s32.totalorder %s28, 0
    %p76 = por %p74, %p75
    %s77 = sld [smem:[#allocation8 + %s30]]
    %p78 = scmp.lt.s32.totalorder %s31, %s77
    %s79 = scalar_select %p78, %s31, %s77
    %s80 = sld [smem:[#allocation8 + %s44]]
    %p81 = scmp.lt.s32.totalorder %s40, %s80
    %s82 = scalar_select %p81, %s40, %s80
    %s83 = ssub.s32 %s29, %s48
    %s84 = ssub.s32 %s79, %s82
    %s85 = sor.u32 %s83, %s84
    %p86 = scmp.eq.s32.totalorder %s85, 0
    %s88 = sadd.s32 %s87, 1
    %s89 = scalar_select %p86, %s87, %s88
    %p92 = pneg %p86
    %p93 = scmp.eq.s32.totalorder %s22, 3
    %p94 = por %p92, %p93
    %p95 = scmp.ne.s32.totalorder %s87, %s90
    %p96 = scmp.eq.s32.totalorder %s22, 0
    %p97 = por %p95, %p96
    %p98 = scmp.ne.s32.totalorder %s87, %s90
    %p99 = scmp.eq.s32.totalorder %s27, 3
    %p100 = por %p98, %p99
    %p101 = scmp.ne.s32.totalorder %s90, %s91
    %p102 = scmp.eq.s32.totalorder %s27, 0
    %p103 = por %p101, %p102
    %p104 = scmp.ne.s32.totalorder %s90, %s91
    %p105 = scmp.eq.s32.totalorder %s28, 3
    %p106 = por %p104, %p105
    %p108 = scmp.ne.s32.totalorder %s91, %s107
    %p109 = scmp.eq.s32.totalorder %s28, 0
    %p110 = por %p108, %p109
    %s111 = sld [smem:[#allocation8 + %s30]]
    %p112 = scmp.lt.s32.totalorder %s31, %s111
    %s113 = scalar_select %p112, %s31, %s111
    %s114 = sld [smem:[#allocation8 + %s44]]
    %p115 = scmp.lt.s32.totalorder %s40, %s114
    %s116 = scalar_select %p115, %s40, %s114
    %s117 = ssub.s32 %s29, %s48
    %s118 = ssub.s32 %s113, %s116
    %s119 = sor.u32 %s117, %s118
    %p120 = scmp.eq.s32.totalorder %s119, 0
    %s122 = sadd.s32 %s121, 1
    %s123 = scalar_select %p120, %s121, %s122
    %p126 = pneg %p120
    %p127 = scmp.eq.s32.totalorder %s22, 3
    %p128 = por %p126, %p127
    %p129 = scmp.ne.s32.totalorder %s121, %s124
    %p130 = scmp.eq.s32.totalorder %s22, 0
    %p131 = por %p129, %p130
    %p132 = scmp.ne.s32.totalorder %s121, %s124
    %p133 = scmp.eq.s32.totalorder %s27, 3
    %p134 = por %p132, %p133
    %p135 = scmp.ne.s32.totalorder %s124, %s125
    %p136 = scmp.eq.s32.totalorder %s27, 0
    %p137 = por %p135, %p136
    %p138 = scmp.ne.s32.totalorder %s124, %s125
    %p139 = scmp.eq.s32.totalorder %s28, 3
    %p140 = por %p138, %p139
    %p142 = scmp.ne.s32.totalorder %s125, %s141
    %p143 = scmp.eq.s32.totalorder %s28, 0
    %p144 = por %p142, %p143
    %s145 = sld [smem:[#allocation8 + %s30]]
    %p146 = scmp.lt.s32.totalorder %s31, %s145
    %s147 = scalar_select %p146, %s31, %s145
    %s148 = sld [smem:[#allocation8 + %s44]]
    %p149 = scmp.lt.s32.totalorder %s40, %s148
    %s150 = scalar_select %p149, %s40, %s148
    %s151 = ssub.s32 %s30, %s44
    %s152 = ssub.s32 %s147, %s150
    %s153 = sor.u32 %s151, %s152
    %p154 = scmp.eq.s32.totalorder %s153, 0
    %s156 = sadd.s32 %s155, 1
    %s157 = scalar_select %p154, %s155, %s156
    %p160 = pneg %p154
    %p161 = scmp.eq.s32.totalorder %s22, 3
    %p162 = por %p160, %p161
    %p163 = scmp.ne.s32.totalorder %s155, %s158
    %p164 = scmp.eq.s32.totalorder %s22, 0
    %p165 = por %p163, %p164
    %p166 = scmp.ne.s32.totalorder %s155, %s158
    %p167 = scmp.eq.s32.totalorder %s27, 3
    %p168 = por %p166, %p167
    %p169 = scmp.ne.s32.totalorder %s158, %s159
    %p170 = scmp.eq.s32.totalorder %s27, 0
    %p171 = por %p169, %p170
    %p172 = scmp.ne.s32.totalorder %s158, %s159
    %p173 = scmp.eq.s32.totalorder %s28, 3
    %p174 = por %p172, %p173
    %p176 = scmp.ne.s32.totalorder %s159, %s175
    %p177 = scmp.eq.s32.totalorder %s28, 0
    %p178 = por %p176, %p177
    %s179 = ssub.s32 %s29, %s48
    %s180 = ssub.s32 %s30, %s44
    %s181 = sor.u32 %s179, %s180
    %p182 = scmp.eq.s32.totalorder %s181, 0
    %s184 = sadd.s32 %s183, 1
    %s185 = scalar_select %p182, %s183, %s184
    %p188 = pneg %p182
    %p189 = scmp.eq.s32.totalorder %s22, 3
    %p190 = por %p188, %p189
    %p191 = scmp.ne.s32.totalorder %s183, %s186
    %p192 = scmp.eq.s32.totalorder %s22, 0
    %p193 = por %p191, %p192
    %p194 = scmp.ne.s32.totalorder %s183, %s186
    %p195 = scmp.eq.s32.totalorder %s27, 3
    %p196 = por %p194, %p195
    %p197 = scmp.ne.s32.totalorder %s186, %s187
    %p198 = scmp.eq.s32.totalorder %s27, 0
    %p199 = por %p197, %p198
    %p200 = scmp.ne.s32.totalorder %s186, %s187
    %p201 = scmp.eq.s32.totalorder %s28, 3
    %p202 = por %p200, %p201
    %p204 = scmp.ne.s32.totalorder %s187, %s203
    %p205 = scmp.eq.s32.totalorder %s28, 0
    %p206 = por %p204, %p205
    %p207 = scmp.le.s32.totalorder 1, %s22
    %p208 = scmp.lt.s32.totalorder %s22, 5
    %p209 = pnand %p207, %p208
    %p210 = pneg %p209
    // Predicated region
    $region9: #{tpu_custom_call.1} parent=5 // pred_check
      _
    $region10: #{tpu_custom_call.1} parent=5 // pred_check_branch
      %212 = sbr.rel (%p209) target = $region12
    $region11: #{tpu_custom_call.1} parent=5 // pred_region
      %s213 = ssub.s32 %s22, 1
    $region12: #{tpu_custom_call.1} parent=5 // pred_fallthru
      _
    %p214 = scmp.lt.s32.totalorder %s22, 4
    // Predicated region
    $region13: #{tpu_custom_call.1} parent=5 // pred_check
      %p215 = pneg %p214
    $region14: #{tpu_custom_call.1} parent=5 // pred_check_branch
      %217 = sbr.rel (%p215) target = $region16
    $region15: #{tpu_custom_call.1} parent=5 // pred_region
      // Predicated region
      $region17: #{tpu_custom_call.1} parent=15 // pred_check
        %p218 = pneg %p63
      $region18: #{tpu_custom_call.1} parent=15 // pred_check_branch
        %220 = sbr.rel (%p218) target = $region20
      $region19: #{tpu_custom_call.1} parent=15 // pred_region
        %s221 = smul.u32 16, %s30
        %p222 = scmp.lt.s32.totalorder %s29, 1
        %s223 = scalar_select %p222, %s29, 1
        %p224 = scmp.lt.s32.totalorder %s221, 31
        %s225 = scalar_select %p224, %s221, 31
        %s226 = smul.addr %s223, 32
        %s227 = sadd.s32 %s225, %s226
        %s228 = smul.addr %s227, 8
        %s229 = scalar_lea.vmem %s2, %s228
        %s230 = smul.u32 16, %s30
      $region20: #{tpu_custom_call.1} parent=15 // pred_fallthru
        _
      // Predicated region
      $region21: #{tpu_custom_call.1} parent=15 // pred_check
        %p231 = pneg %p97
      $region22: #{tpu_custom_call.1} parent=15 // pred_check_branch
        %233 = sbr.rel (%p231) target = $region24
      $region23: #{tpu_custom_call.1} parent=15 // pred_region
        %s234 = sld [smem:[#allocation8 + %s30]]
        %p235 = scmp.lt.s32.totalorder %s31, %s234
        %s236 = scalar_select %p235, %s31, %s234
        %s237 = smul.u32 32, %s236
        %p238 = scmp.lt.s32.totalorder %s29, 1
        %s239 = scalar_select %p238, %s29, 1
        %p240 = scmp.lt.s32.totalorder %s237, 31
        %s241 = scalar_select %p240, %s237, 31
        %s242 = smul.addr %s239, 32
        %s243 = sadd.s32 %s241, %s242
        %s244 = smul.addr %s243, 8
        %s245 = scalar_lea.vmem %s3, %s244
        %s246 = sld [smem:[#allocation8 + %s30]]
        %p247 = scmp.lt.s32.totalorder %s31, %s246
        %s248 = scalar_select %p247, %s31, %s246
        %s249 = smul.u32 32, %s248
      $region24: #{tpu_custom_call.1} parent=15 // pred_fallthru
        _
      // Predicated region
      $region25: #{tpu_custom_call.1} parent=15 // pred_check
        %p250 = pneg %p131
      $region26: #{tpu_custom_call.1} parent=15 // pred_check_branch
        %252 = sbr.rel (%p250) target = $region28
      $region27: #{tpu_custom_call.1} parent=15 // pred_region
        %s253 = sld [smem:[#allocation8 + %s30]]
        %p254 = scmp.lt.s32.totalorder %s31, %s253
        %s255 = scalar_select %p254, %s31, %s253
        %s256 = smul.u32 32, %s255
        %p257 = scmp.lt.s32.totalorder %s29, 1
        %s258 = scalar_select %p257, %s29, 1
        %p259 = scmp.lt.s32.totalorder %s256, 31
        %s260 = scalar_select %p259, %s256, 31
        %s261 = smul.addr %s258, 32
        %s262 = sadd.s32 %s260, %s261
        %s263 = smul.addr %s262, 8
        %s264 = scalar_lea.vmem %s4, %s263
        %s265 = sld [smem:[#allocation8 + %s30]]
        %p266 = scmp.lt.s32.totalorder %s31, %s265
        %s267 = scalar_select %p266, %s31, %s265
        %s268 = smul.u32 32, %s267
      $region28: #{tpu_custom_call.1} parent=15 // pred_fallthru
        _
      // Predicated region
      $region29: #{tpu_custom_call.1} parent=15 // pred_check
        %p269 = pneg %p165
      $region30: #{tpu_custom_call.1} parent=15 // pred_check_branch
        %271 = sbr.rel (%p269) target = $region32
      $region31: #{tpu_custom_call.1} parent=15 // pred_region
        %s272 = sld [smem:[#allocation8 + %s30]]
        %p273 = scmp.lt.s32.totalorder %s31, %s272
        %s274 = scalar_select %p273, %s31, %s272
        %s275 = smul.u32 4, %s30
        %s276 = smul.u32 2, %s274
        %p277 = scmp.lt.s32.totalorder %s275, 7
        %s278 = scalar_select %p277, %s275, 7
        %p279 = scmp.lt.s32.totalorder %s276, 1
        %s280 = scalar_select %p279, %s276, 1
        %s281 = smul.addr %s278, 2
        %s282 = sadd.s32 %s280, %s281
        %s283 = smul.addr %s282, 8
        %s284 = scalar_lea.vmem %s5, %s283
        %s285 = sld [smem:[#allocation8 + %s30]]
        %p286 = scmp.lt.s32.totalorder %s31, %s285
        %s287 = scalar_select %p286, %s31, %s285
        %s288 = smul.u32 4, %s30
        %s289 = smul.u32 2, %s287
      $region32: #{tpu_custom_call.1} parent=15 // pred_fallthru
        _
    $region16: #{tpu_custom_call.1} parent=5 // pred_fallthru
      _
    %p290 = scmp.le.s32.totalorder 1, %s22
    %p291 = scmp.lt.s32.totalorder %s22, 5
    %p292 = pnand %p290, %p291
    %p293 = pneg %p292
    // Predicated region
    $region33: #{tpu_custom_call.1} parent=5 // pred_check
      _
    $region34: #{tpu_custom_call.1} parent=5 // pred_check_branch
      %295 = sbr.rel (%p292) target = $region36
    $region35: #{tpu_custom_call.1} parent=5 // pred_region
      %s296 = ssub.s32 %s22, 1
      %s297 = smul.u32 16, %s33
      %p298 = scmp.lt.s32.totalorder %s32, 1
      %s299 = scalar_select %p298, %s32, 1
      %p300 = scmp.lt.s32.totalorder %s297, 31
      %s301 = scalar_select %p300, %s297, 31
      %s302 = smul.addr %s299, 32
      %s303 = sadd.s32 %s301, %s302
      %s304 = smul.addr %s303, 8
      %s305 = scalar_lea.vmem %s2, %s304
      %p306 = pneg %p69
      %p307 = pneg %p66
      %s308 = sld [smem:[#allocation8 + %s33]]
      %p309 = scmp.lt.s32.totalorder %s34, %s308
      %s310 = scalar_select %p309, %s34, %s308
      %s311 = smul.u32 32, %s310
      %p312 = scmp.lt.s32.totalorder %s32, 1
      %s313 = scalar_select %p312, %s32, 1
      %p314 = scmp.lt.s32.totalorder %s311, 31
      %s315 = scalar_select %p314, %s311, 31
      %s316 = smul.addr %s313, 32
      %s317 = sadd.s32 %s315, %s316
      %s318 = smul.addr %s317, 8
      %s319 = scalar_lea.vmem %s3, %s318
      %p320 = pneg %p103
      %p321 = pneg %p100
      %s322 = sld [smem:[#allocation8 + %s33]]
      %p323 = scmp.lt.s32.totalorder %s34, %s322
      %s324 = scalar_select %p323, %s34, %s322
      %s325 = smul.u32 32, %s324
      %p326 = scmp.lt.s32.totalorder %s32, 1
      %s327 = scalar_select %p326, %s32, 1
      %p328 = scmp.lt.s32.totalorder %s325, 31
      %s329 = scalar_select %p328, %s325, 31
      %s330 = smul.addr %s327, 32
      %s331 = sadd.s32 %s329, %s330
      %s332 = smul.addr %s331, 8
      %s333 = scalar_lea.vmem %s4, %s332
      %p334 = pneg %p137
      %p335 = pneg %p134
      %s336 = sld [smem:[#allocation8 + %s33]]
      %p337 = scmp.lt.s32.totalorder %s34, %s336
      %s338 = scalar_select %p337, %s34, %s336
      %s339 = smul.u32 4, %s33
      %s340 = smul.u32 2, %s338
      %p341 = scmp.lt.s32.totalorder %s339, 7
      %s342 = scalar_select %p341, %s339, 7
      %p343 = scmp.lt.s32.totalorder %s340, 1
      %s344 = scalar_select %p343, %s340, 1
      %s345 = smul.addr %s342, 2
      %s346 = sadd.s32 %s344, %s345
      %s347 = smul.addr %s346, 8
      %s348 = scalar_lea.vmem %s5, %s347
      %p349 = pneg %p171
      %p350 = pneg %p168
      %p351 = pneg %p199
      %p352 = pneg %p196
      %s353 = smul.u32 16, %s33
      %p354 = scmp.lt.s32.totalorder %s32, 1
      %s355 = scalar_select %p354, %s32, 1
      %p356 = scmp.lt.s32.totalorder %s353, 31
      %s357 = scalar_select %p356, %s353, 31
      %s358 = smul.addr %s355, 32
      %s359 = sadd.s32 %s357, %s358
      %s360 = smul.addr %s359, 8
      %s361 = scalar_lea.vmem %s6, %s360
      %s362 = smul.u32 16, %s33
      %p363 = scmp.lt.s32.totalorder %s32, 1
      %s364 = scalar_select %p363, %s32, 1
      %p365 = scmp.lt.s32.totalorder %s362, 31
      %s366 = scalar_select %p365, %s362, 31
      %s367 = smul.addr %s364, 32
      %s368 = sadd.s32 %s366, %s367
      %s369 = smul.addr %s368, 8
      %s370 = scalar_lea.vmem %s2, %s369
      %s371 = smul.u32 16, %s33
      %s372 = sld [smem:[#allocation8 + %s33]]
      %p373 = scmp.lt.s32.totalorder %s34, %s372
      %s374 = scalar_select %p373, %s34, %s372
      %s375 = smul.u32 32, %s374
      %p376 = scmp.lt.s32.totalorder %s32, 1
      %s377 = scalar_select %p376, %s32, 1
      %p378 = scmp.lt.s32.totalorder %s375, 31
      %s379 = scalar_select %p378, %s375, 31
      %s380 = smul.addr %s377, 32
      %s381 = sadd.s32 %s379, %s380
      %s382 = smul.addr %s381, 8
      %s383 = scalar_lea.vmem %s3, %s382
      %s384 = sld [smem:[#allocation8 + %s33]]
      %p385 = scmp.lt.s32.totalorder %s34, %s384
      %s386 = scalar_select %p385, %s34, %s384
      %s387 = smul.u32 32, %s386
      %s388 = sld [smem:[#allocation8 + %s33]]
      %p389 = scmp.lt.s32.totalorder %s34, %s388
      %s390 = scalar_select %p389, %s34, %s388
      %s391 = smul.u32 32, %s390
      %p392 = scmp.lt.s32.totalorder %s32, 1
      %s393 = scalar_select %p392, %s32, 1
      %p394 = scmp.lt.s32.totalorder %s391, 31
      %s395 = scalar_select %p394, %s391, 31
      %s396 = smul.addr %s393, 32
      %s397 = sadd.s32 %s395, %s396
      %s398 = smul.addr %s397, 8
      %s399 = scalar_lea.vmem %s4, %s398
      %s400 = sld [smem:[#allocation8 + %s33]]
      %p401 = scmp.lt.s32.totalorder %s34, %s400
      %s402 = scalar_select %p401, %s34, %s400
      %s403 = smul.u32 32, %s402
      %s404 = sld [smem:[#allocation8 + %s33]]
      %p405 = scmp.lt.s32.totalorder %s34, %s404
      %s406 = scalar_select %p405, %s34, %s404
      %s407 = smul.u32 4, %s33
      %s408 = smul.u32 2, %s406
      %p409 = scmp.lt.s32.totalorder %s407, 7
      %s410 = scalar_select %p409, %s407, 7
      %p411 = scmp.lt.s32.totalorder %s408, 1
      %s412 = scalar_select %p411, %s408, 1
      %s413 = smul.addr %s410, 2
      %s414 = sadd.s32 %s412, %s413
      %s415 = smul.addr %s414, 8
      %s416 = scalar_lea.vmem %s5, %s415
      %s417 = sld [smem:[#allocation8 + %s33]]
      %p418 = scmp.lt.s32.totalorder %s34, %s417
      %s419 = scalar_select %p418, %s34, %s417
      %s420 = smul.u32 4, %s33
      %s421 = smul.u32 2, %s419
      %s422 = smul.u32 16, %s33
      %p423 = scmp.lt.s32.totalorder %s32, 1
      %s424 = scalar_select %p423, %s32, 1
      %p425 = scmp.lt.s32.totalorder %s422, 31
      %s426 = scalar_select %p425, %s422, 31
      %s427 = smul.addr %s424, 32
      %s428 = sadd.s32 %s426, %s427
      %s429 = smul.addr %s428, 8
      %s430 = scalar_lea.vmem %s6, %s429
      %s431 = smul.u32 16, %s33
      %p435 = scmp.eq.s32.totalorder %s34, 0
      // Predicated region
      $region37: #{tpu_custom_call.1} parent=35 // pred_check
        %p436 = pneg %p435
      $region38: #{tpu_custom_call.1} parent=35 // pred_check_branch
        %438 = sbr.rel (%p436) target = $region40
      $region39: #{tpu_custom_call.1} parent=35 // pred_region
        %v439 = vld [vmem:[%s370] sm:$0xff]
        %v440 = vld [vmem:[%s370 + $0x8] sm:$0xff]
        %v441 = vld [vmem:[%s370 + $0x10] sm:$0xff]
        %v442 = vld [vmem:[%s370 + $0x18] sm:$0xff]
        %v443 = vld [vmem:[%s370 + $0x20] sm:$0xff]
        %v444 = vld [vmem:[%s370 + $0x28] sm:$0xff]
        %v445 = vld [vmem:[%s370 + $0x30] sm:$0xff]
        %v446 = vld [vmem:[%s370 + $0x38] sm:$0xff]
        %v447 = vld [vmem:[%s370 + $0x40] sm:$0xff]
        %v448 = vld [vmem:[%s370 + $0x48] sm:$0xff]
        %v449 = vld [vmem:[%s370 + $0x50] sm:$0xff]
        %v450 = vld [vmem:[%s370 + $0x58] sm:$0xff]
        %v451 = vld [vmem:[%s370 + $0x60] sm:$0xff]
        %v452 = vld [vmem:[%s370 + $0x68] sm:$0xff]
        %v453 = vld [vmem:[%s370 + $0x70] sm:$0xff]
        %v454 = vld [vmem:[%s370 + $0x78] sm:$0xff]
        %v455 = vmul.f32 %v439, 0.17677669
        %v456 = vmul.f32 %v440, 0.17677669
        %v457 = vmul.f32 %v441, 0.17677669
        %v458 = vmul.f32 %v442, 0.17677669
        %v459 = vmul.f32 %v443, 0.17677669
        %v460 = vmul.f32 %v444, 0.17677669
        %v461 = vmul.f32 %v445, 0.17677669
        %v462 = vmul.f32 %v446, 0.17677669
        %v463 = vmul.f32 %v447, 0.17677669
        %v464 = vmul.f32 %v448, 0.17677669
        %v465 = vmul.f32 %v449, 0.17677669
        %v466 = vmul.f32 %v450, 0.17677669
        %v467 = vmul.f32 %v451, 0.17677669
        %v468 = vmul.f32 %v452, 0.17677669
        %v469 = vmul.f32 %v453, 0.17677669
        %v470 = vmul.f32 %v454, 0.17677669
        %v471 = vpack.c.bf16 %v456, %v455
        %v472 = vpack.c.bf16 %v458, %v457
        %v473 = vpack.c.bf16 %v460, %v459
        %v474 = vpack.c.bf16 %v462, %v461
        %v475 = vpack.c.bf16 %v464, %v463
        %v476 = vpack.c.bf16 %v466, %v465
        %v477 = vpack.c.bf16 %v468, %v467
        %v478 = vpack.c.bf16 %v470, %v469
        %vm479 = vcmask 261120
        %480 = vst.msk [vmem:[#allocation2] sm:$0xff] %vm479, %v471
        %481 = vst.msk [vmem:[#allocation2 + $0x8] sm:$0xff] %vm479, %v472
        %482 = vst.msk [vmem:[#allocation2 + $0x10] sm:$0xff] %vm479, %v473
        %483 = vst.msk [vmem:[#allocation2 + $0x18] sm:$0xff] %vm479, %v474
        %484 = vst.msk [vmem:[#allocation2 + $0x20] sm:$0xff] %vm479, %v475
        %485 = vst.msk [vmem:[#allocation2 + $0x28] sm:$0xff] %vm479, %v476
        %486 = vst.msk [vmem:[#allocation2 + $0x30] sm:$0xff] %vm479, %v477
        %487 = vst.msk [vmem:[#allocation2 + $0x38] sm:$0xff] %vm479, %v478
        %vm488 = vcmask 7168
        %489 = vst.msk [vmem:[#allocation3] sm:$0xff] %vm488, -inf
        %490 = vst.msk [vmem:[#allocation3 + $0x8] sm:$0xff] %vm488, -inf
        %491 = vst.msk [vmem:[#allocation3 + $0x10] sm:$0xff] %vm488, -inf
        %492 = vst.msk [vmem:[#allocation3 + $0x18] sm:$0xff] %vm488, -inf
        %493 = vst.msk [vmem:[#allocation3 + $0x20] sm:$0xff] %vm488, -inf
        %494 = vst.msk [vmem:[#allocation3 + $0x28] sm:$0xff] %vm488, -inf
        %495 = vst.msk [vmem:[#allocation3 + $0x30] sm:$0xff] %vm488, -inf
        %496 = vst.msk [vmem:[#allocation3 + $0x38] sm:$0xff] %vm488, -inf
        %497 = vst.msk [vmem:[#allocation3 + $0x40] sm:$0xff] %vm488, -inf
        %498 = vst.msk [vmem:[#allocation3 + $0x48] sm:$0xff] %vm488, -inf
        %499 = vst.msk [vmem:[#allocation3 + $0x50] sm:$0xff] %vm488, -inf
        %500 = vst.msk [vmem:[#allocation3 + $0x58] sm:$0xff] %vm488, -inf
        %501 = vst.msk [vmem:[#allocation3 + $0x60] sm:$0xff] %vm488, -inf
        %502 = vst.msk [vmem:[#allocation3 + $0x68] sm:$0xff] %vm488, -inf
        %503 = vst.msk [vmem:[#allocation3 + $0x70] sm:$0xff] %vm488, -inf
        %504 = vst.msk [vmem:[#allocation3 + $0x78] sm:$0xff] %vm488, -inf
        %505 = vst.msk [vmem:[#allocation4] sm:$0xff] %vm488, 0.0
        %506 = vst.msk [vmem:[#allocation4 + $0x8] sm:$0xff] %vm488, 0.0
        %507 = vst.msk [vmem:[#allocation4 + $0x10] sm:$0xff] %vm488, 0.0
        %508 = vst.msk [vmem:[#allocation4 + $0x18] sm:$0xff] %vm488, 0.0
        %509 = vst.msk [vmem:[#allocation4 + $0x20] sm:$0xff] %vm488, 0.0
        %510 = vst.msk [vmem:[#allocation4 + $0x28] sm:$0xff] %vm488, 0.0
        %511 = vst.msk [vmem:[#allocation4 + $0x30] sm:$0xff] %vm488, 0.0
        %512 = vst.msk [vmem:[#allocation4 + $0x38] sm:$0xff] %vm488, 0.0
        %513 = vst.msk [vmem:[#allocation4 + $0x40] sm:$0xff] %vm488, 0.0
        %514 = vst.msk [vmem:[#allocation4 + $0x48] sm:$0xff] %vm488, 0.0
        %515 = vst.msk [vmem:[#allocation4 + $0x50] sm:$0xff] %vm488, 0.0
        %516 = vst.msk [vmem:[#allocation4 + $0x58] sm:$0xff] %vm488, 0.0
        %517 = vst.msk [vmem:[#allocation4 + $0x60] sm:$0xff] %vm488, 0.0
        %518 = vst.msk [vmem:[#allocation4 + $0x68] sm:$0xff] %vm488, 0.0
        %519 = vst.msk [vmem:[#allocation4 + $0x70] sm:$0xff] %vm488, 0.0
        %520 = vst.msk [vmem:[#allocation4 + $0x78] sm:$0xff] %vm488, 0.0
        %521 = vst.msk [vmem:[#allocation5] sm:$0xff] %vm479, 0.0
        %522 = vst.msk [vmem:[#allocation5 + $0x8] sm:$0xff] %vm479, 0.0
        %523 = vst.msk [vmem:[#allocation5 + $0x10] sm:$0xff] %vm479, 0.0
        %524 = vst.msk [vmem:[#allocation5 + $0x18] sm:$0xff] %vm479, 0.0
        %525 = vst.msk [vmem:[#allocation5 + $0x20] sm:$0xff] %vm479, 0.0
        %526 = vst.msk [vmem:[#allocation5 + $0x28] sm:$0xff] %vm479, 0.0
        %527 = vst.msk [vmem:[#allocation5 + $0x30] sm:$0xff] %vm479, 0.0
        %528 = vst.msk [vmem:[#allocation5 + $0x38] sm:$0xff] %vm479, 0.0
        %529 = vst.msk [vmem:[#allocation5 + $0x40] sm:$0xff] %vm479, 0.0
        %530 = vst.msk [vmem:[#allocation5 + $0x48] sm:$0xff] %vm479, 0.0
        %531 = vst.msk [vmem:[#allocation5 + $0x50] sm:$0xff] %vm479, 0.0
        %532 = vst.msk [vmem:[#allocation5 + $0x58] sm:$0xff] %vm479, 0.0
        %533 = vst.msk [vmem:[#allocation5 + $0x60] sm:$0xff] %vm479, 0.0
        %534 = vst.msk [vmem:[#allocation5 + $0x68] sm:$0xff] %vm479, 0.0
        %535 = vst.msk [vmem:[#allocation5 + $0x70] sm:$0xff] %vm479, 0.0
        %536 = vst.msk [vmem:[#allocation5 + $0x78] sm:$0xff] %vm479, 0.0
      $region40: #{tpu_custom_call.1} parent=35 // pred_fallthru
        _
      %s537 = sadd.s32 %s33, %s34
      %s538 = sld [smem:[#allocation7 + %s537]]
      %p539 = scmp.ne.s32.totalorder %s538, 0
      // Predicated region
      $region41: #{tpu_custom_call.1} parent=35 // pred_check
        %p540 = pneg %p539
      $region42: #{tpu_custom_call.1} parent=35 // pred_check_branch
        %542 = sbr.rel (%p540) target = $region44
      $region43: #{tpu_custom_call.1} parent=35 // pred_region
        %v543 = vld [vmem:[#allocation2] sm:$0xff]
        %v544 = vld [vmem:[#allocation2 + $0x8] sm:$0xff]
        %v545 = vld [vmem:[#allocation2 + $0x10] sm:$0xff]
        %v546 = vld [vmem:[#allocation2 + $0x18] sm:$0xff]
        %v547 = vld [vmem:[#allocation2 + $0x20] sm:$0xff]
        %v548 = vld [vmem:[#allocation2 + $0x28] sm:$0xff]
        %v549 = vld [vmem:[#allocation2 + $0x30] sm:$0xff]
        %v550 = vld [vmem:[#allocation2 + $0x38] sm:$0xff]
        %v551 = vld [vmem:[%s383] sm:$0xff]
        %v552 = vld [vmem:[%s383 + $0x8] sm:$0xff]
        %v553 = vld [vmem:[%s383 + $0x10] sm:$0xff]
        %v554 = vld [vmem:[%s383 + $0x18] sm:$0xff]
        %v555 = vld [vmem:[%s383 + $0x20] sm:$0xff]
        %v556 = vld [vmem:[%s383 + $0x28] sm:$0xff]
        %v557 = vld [vmem:[%s383 + $0x30] sm:$0xff]
        %v558 = vld [vmem:[%s383 + $0x38] sm:$0xff]
        %v559 = vld [vmem:[%s383 + $0x40] sm:$0xff]
        %v560 = vld [vmem:[%s383 + $0x48] sm:$0xff]
        %v561 = vld [vmem:[%s383 + $0x50] sm:$0xff]
        %v562 = vld [vmem:[%s383 + $0x58] sm:$0xff]
        %v563 = vld [vmem:[%s383 + $0x60] sm:$0xff]
        %v564 = vld [vmem:[%s383 + $0x68] sm:$0xff]
        %v565 = vld [vmem:[%s383 + $0x70] sm:$0xff]
        %v566 = vld [vmem:[%s383 + $0x78] sm:$0xff]
        %v567 = vld [vmem:[%s383 + $0x80] sm:$0xff]
        %v568 = vld [vmem:[%s383 + $0x88] sm:$0xff]
        %v569 = vld [vmem:[%s383 + $0x90] sm:$0xff]
        %v570 = vld [vmem:[%s383 + $0x98] sm:$0xff]
        %v571 = vld [vmem:[%s383 + $0xa0] sm:$0xff]
        %v572 = vld [vmem:[%s383 + $0xa8] sm:$0xff]
        %v573 = vld [vmem:[%s383 + $0xb0] sm:$0xff]
        %v574 = vld [vmem:[%s383 + $0xb8] sm:$0xff]
        %v575 = vld [vmem:[%s383 + $0xc0] sm:$0xff]
        %v576 = vld [vmem:[%s383 + $0xc8] sm:$0xff]
        %v577 = vld [vmem:[%s383 + $0xd0] sm:$0xff]
        %v578 = vld [vmem:[%s383 + $0xd8] sm:$0xff]
        %v579 = vld [vmem:[%s383 + $0xe0] sm:$0xff]
        %v580 = vld [vmem:[%s383 + $0xe8] sm:$0xff]
        %v581 = vld [vmem:[%s383 + $0xf0] sm:$0xff]
        %v582 = vld [vmem:[%s383 + $0xf8] sm:$0xff]
        %v583 = vpack.c.bf16 %v552, %v551
        %v584 = vpack.c.bf16 %v554, %v553
        %v585 = vpack.c.bf16 %v556, %v555
        %v586 = vpack.c.bf16 %v558, %v557
        %v587 = vpack.c.bf16 %v560, %v559
        %v588 = vpack.c.bf16 %v562, %v561
        %v589 = vpack.c.bf16 %v564, %v563
        %v590 = vpack.c.bf16 %v566, %v565
        %v591 = vpack.c.bf16 %v568, %v567
        %v592 = vpack.c.bf16 %v570, %v569
        %v593 = vpack.c.bf16 %v572, %v571
        %v594 = vpack.c.bf16 %v574, %v573
        %v595 = vpack.c.bf16 %v576, %v575
        %v596 = vpack.c.bf16 %v578, %v577
        %v597 = vpack.c.bf16 %v580, %v579
        %v598 = vpack.c.bf16 %v582, %v581
        %v599 = vld [vmem:[%s399] sm:$0xff]
        %v600 = vld [vmem:[%s399 + $0x8] sm:$0xff]
        %v601 = vld [vmem:[%s399 + $0x10] sm:$0xff]
        %v602 = vld [vmem:[%s399 + $0x18] sm:$0xff]
        %v603 = vld [vmem:[%s399 + $0x20] sm:$0xff]
        %v604 = vld [vmem:[%s399 + $0x28] sm:$0xff]
        %v605 = vld [vmem:[%s399 + $0x30] sm:$0xff]
        %v606 = vld [vmem:[%s399 + $0x38] sm:$0xff]
        %v607 = vld [vmem:[%s399 + $0x40] sm:$0xff]
        %v608 = vld [vmem:[%s399 + $0x48] sm:$0xff]
        %v609 = vld [vmem:[%s399 + $0x50] sm:$0xff]
        %v610 = vld [vmem:[%s399 + $0x58] sm:$0xff]
        %v611 = vld [vmem:[%s399 + $0x60] sm:$0xff]
        %v612 = vld [vmem:[%s399 + $0x68] sm:$0xff]
        %v613 = vld [vmem:[%s399 + $0x70] sm:$0xff]
        %v614 = vld [vmem:[%s399 + $0x78] sm:$0xff]
        %v615 = vld [vmem:[%s399 + $0x80] sm:$0xff]
        %v616 = vld [vmem:[%s399 + $0x88] sm:$0xff]
        %v617 = vld [vmem:[%s399 + $0x90] sm:$0xff]
        %v618 = vld [vmem:[%s399 + $0x98] sm:$0xff]
        %v619 = vld [vmem:[%s399 + $0xa0] sm:$0xff]
        %v620 = vld [vmem:[%s399 + $0xa8] sm:$0xff]
        %v621 = vld [vmem:[%s399 + $0xb0] sm:$0xff]
        %v622 = vld [vmem:[%s399 + $0xb8] sm:$0xff]
        %v623 = vld [vmem:[%s399 + $0xc0] sm:$0xff]
        %v624 = vld [vmem:[%s399 + $0xc8] sm:$0xff]
        %v625 = vld [vmem:[%s399 + $0xd0] sm:$0xff]
        %v626 = vld [vmem:[%s399 + $0xd8] sm:$0xff]
        %v627 = vld [vmem:[%s399 + $0xe0] sm:$0xff]
        %v628 = vld [vmem:[%s399 + $0xe8] sm:$0xff]
        %v629 = vld [vmem:[%s399 + $0xf0] sm:$0xff]
        %v630 = vld [vmem:[%s399 + $0xf8] sm:$0xff]
        %v631 = vpack.c.bf16 %v600, %v599
        %v632 = vpack.c.bf16 %v602, %v601
        %v633 = vpack.c.bf16 %v604, %v603
        %v634 = vpack.c.bf16 %v606, %v605
        %v635 = vpack.c.bf16 %v608, %v607
        %v636 = vpack.c.bf16 %v610, %v609
        %v637 = vpack.c.bf16 %v612, %v611
        %v638 = vpack.c.bf16 %v614, %v613
        %v639 = vpack.c.bf16 %v616, %v615
        %v640 = vpack.c.bf16 %v618, %v617
        %v641 = vpack.c.bf16 %v620, %v619
        %v642 = vpack.c.bf16 %v622, %v621
        %v643 = vpack.c.bf16 %v624, %v623
        %v644 = vpack.c.bf16 %v626, %v625
        %v645 = vpack.c.bf16 %v628, %v627
        %v646 = vpack.c.bf16 %v630, %v629
        %v647 = vld [vmem:[%s416] sm:$0xff]
        %v648 = vld [vmem:[%s416 + $0x8] sm:$0xff]
        %v649 = vld [vmem:[%s416 + $0x10] sm:$0xff]
        %v650 = vld [vmem:[%s416 + $0x18] sm:$0xff]
        %v651 = vld [vmem:[%s416 + $0x20] sm:$0xff]
        %v652 = vld [vmem:[%s416 + $0x28] sm:$0xff]
        %v653 = vld [vmem:[%s416 + $0x30] sm:$0xff]
        %v654 = vld [vmem:[%s416 + $0x38] sm:$0xff]
        %vm655 = vcmask 261120
        %v657 = vsel %vm655, %v543, 0
        %v660 = vsel %vm655, %v544, 0
        %v663 = vsel %vm655, %v545, 0
        %v666 = vsel %vm655, %v546, 0
        %v669 = vsel %vm655, %v547, 0
        %v672 = vsel %vm655, %v548, 0
        %v675 = vsel %vm655, %v549, 0
        %v678 = vsel %vm655, %v550, 0
        %v681 = vsel %vm655, %v583, 0
        %v684 = vsel %vm655, %v584, 0
        %v687 = vsel %vm655, %v585, 0
        %v690 = vsel %vm655, %v586, 0
        %v693 = vsel %vm655, %v587, 0
        %v696 = vsel %vm655, %v588, 0
        %v699 = vsel %vm655, %v589, 0
        %v702 = vsel %vm655, %v590, 0
        %v705 = vsel %vm655, %v591, 0
        %v708 = vsel %vm655, %v592, 0
        %v711 = vsel %vm655, %v593, 0
        %v714 = vsel %vm655, %v594, 0
        %v717 = vsel %vm655, %v595, 0
        %v720 = vsel %vm655, %v596, 0
        %v723 = vsel %vm655, %v597, 0
        %v726 = vsel %vm655, %v598, 0
        %728 = vmatprep.subr.bf16.mxu0 0
        %729 = vmatpush1.bf16.xpose.msra.mxu0 %v681
        %730 = vmatprep.subr.bf16.mxu0 0
        %731 = vmatpush1.bf16.xpose.msra.mxu0 %v684
        %732 = vmatprep.subr.bf16.mxu0 0
        %733 = vmatpush1.bf16.xpose.msra.mxu0 %v687
        %734 = vmatprep.subr.bf16.mxu0 0
        %735 = vmatpush1.bf16.xpose.msra.mxu0 %v690
        %736 = vmatprep.subr.bf16.mxu0 0
        %737 = vmatpush1.bf16.xpose.msra.mxu0 %v693
        %738 = vmatprep.subr.bf16.mxu0 0
        %739 = vmatpush1.bf16.xpose.msra.mxu0 %v696
        %740 = vmatprep.subr.bf16.mxu0 0
        %741 = vmatpush1.bf16.xpose.msra.mxu0 %v699
        %742 = vmatprep.subr.bf16.mxu0 0
        %743 = vmatpush1.bf16.xpose.msra.mxu0 %v702
        %744 = vmatprep.subr.bf16.mxu0 0
        %745 = vmatpush1.bf16.xpose.msra.mxu0 %v705
        %746 = vmatprep.subr.bf16.mxu0 0
        %747 = vmatpush1.bf16.xpose.msra.mxu0 %v708
        %748 = vmatprep.subr.bf16.mxu0 0
        %749 = vmatpush1.bf16.xpose.msra.mxu0 %v711
        %750 = vmatprep.subr.bf16.mxu0 0
        %751 = vmatpush1.bf16.xpose.msra.mxu0 %v714
        %752 = vmatprep.subr.bf16.mxu0 0
        %753 = vmatpush1.bf16.xpose.msra.mxu0 %v717
        %754 = vmatprep.subr.bf16.mxu0 0
        %755 = vmatpush1.bf16.xpose.msra.mxu0 %v720
        %756 = vmatprep.subr.bf16.mxu0 0
        %757 = vmatpush1.bf16.xpose.msra.mxu0 %v723
        %758 = vmatprep.subr.bf16.mxu0 0
        %759 = vmatpush1.bf16.xpose.msra.mxu0 %v726
        %760 = vmatprep.mubr.bf16.mxu0 0
        %761 = vmatmul.mubr.bf16.gmra.mrb[0].mxu0 %v657
        %v762 = vpop.f32.mrb[0].mxu0
        %v763 = vadd.f32 0.0, %v762
        %v764 = vpop.f32.mrb[0].mxu0
        %v765 = vadd.f32 0.0, %v764
        %v766 = vpop.f32.mrb[0].mxu0
        %v767 = vadd.f32 0.0, %v766
        %v768 = vpop.f32.mrb[0].mxu0
        %v769 = vadd.f32 0.0, %v768
        %770 = vmatprep.mubr.bf16.mxu0 0
        %771 = vmatmul.mubr.bf16.gmra.mrb[0].mxu0 %v660
        %v772 = vpop.f32.mrb[0].mxu0
        %v773 = vadd.f32 0.0, %v772
        %v774 = vpop.f32.mrb[0].mxu0
        %v775 = vadd.f32 0.0, %v774
        %v776 = vpop.f32.mrb[0].mxu0
        %v777 = vadd.f32 0.0, %v776
        %v778 = vpop.f32.mrb[0].mxu0
        %v779 = vadd.f32 0.0, %v778
        %780 = vmatprep.mubr.bf16.mxu0 0
        %781 = vmatmul.mubr.bf16.gmra.mrb[0].mxu0 %v663
        %v782 = vpop.f32.mrb[0].mxu0
        %v783 = vadd.f32 0.0, %v782
        %v784 = vpop.f32.mrb[0].mxu0
        %v785 = vadd.f32 0.0, %v784
        %v786 = vpop.f32.mrb[0].mxu0
        %v787 = vadd.f32 0.0, %v786
        %v788 = vpop.f32.mrb[0].mxu0
        %v789 = vadd.f32 0.0, %v788
        %790 = vmatprep.mubr.bf16.mxu0 0
        %791 = vmatmul.mubr.bf16.gmra.mrb[0].mxu0 %v666
        %v792 = vpop.f32.mrb[0].mxu0
        %v793 = vadd.f32 0.0, %v792
        %v794 = vpop.f32.mrb[0].mxu0
        %v795 = vadd.f32 0.0, %v794
        %v796 = vpop.f32.mrb[0].mxu0
        %v797 = vadd.f32 0.0, %v796
        %v798 = vpop.f32.mrb[0].mxu0
        %v799 = vadd.f32 0.0, %v798
        %800 = vmatprep.mubr.bf16.mxu0 0
        %801 = vmatmul.mubr.bf16.gmra.mrb[0].mxu0 %v669
        %v802 = vpop.f32.mrb[0].mxu0
        %v803 = vadd.f32 0.0, %v802
        %v804 = vpop.f32.mrb[0].mxu0
        %v805 = vadd.f32 0.0, %v804
        %v806 = vpop.f32.mrb[0].mxu0
        %v807 = vadd.f32 0.0, %v806
        %v808 = vpop.f32.mrb[0].mxu0
        %v809 = vadd.f32 0.0, %v808
        %810 = vmatprep.mubr.bf16.mxu0 0
        %811 = vmatmul.mubr.bf16.gmra.mrb[0].mxu0 %v672
        %v812 = vpop.f32.mrb[0].mxu0
        %v813 = vadd.f32 0.0, %v812
        %v814 = vpop.f32.mrb[0].mxu0
        %v815 = vadd.f32 0.0, %v814
        %v816 = vpop.f32.mrb[0].mxu0
        %v817 = vadd.f32 0.0, %v816
        %v818 = vpop.f32.mrb[0].mxu0
        %v819 = vadd.f32 0.0, %v818
        %820 = vmatprep.mubr.bf16.mxu0 0
        %821 = vmatmul.mubr.bf16.gmra.mrb[0].mxu0 %v675
        %v822 = vpop.f32.mrb[0].mxu0
        %v823 = vadd.f32 0.0, %v822
        %v824 = vpop.f32.mrb[0].mxu0
        %v825 = vadd.f32 0.0, %v824
        %v826 = vpop.f32.mrb[0].mxu0
        %v827 = vadd.f32 0.0, %v826
        %v828 = vpop.f32.mrb[0].mxu0
        %v829 = vadd.f32 0.0, %v828
        %830 = vmatprep.mubr.bf16.mxu0 0
        %831 = vmatmul.mubr.bf16.gmra.mrb[0].mxu0 %v678
        %v832 = vpop.f32.mrb[0].mxu0
        %v833 = vadd.f32 0.0, %v832
        %v834 = vpop.f32.mrb[0].mxu0
        %v835 = vadd.f32 0.0, %v834
        %v836 = vpop.f32.mrb[0].mxu0
        %v837 = vadd.f32 0.0, %v836
        %v838 = vpop.f32.mrb[0].mxu0
        %v839 = vadd.f32 0.0, %v838
        %840 = vdwg.mxu0
        %vm841 = vnez %v647
        %vm842 = vnez %v648
        %vm843 = vnez %v649
        %vm844 = vnez %v650
        %vm845 = vnez %v651
        %vm846 = vnez %v652
        %vm847 = vnez %v653
        %vm848 = vnez %v654
        %v849 = vsel %vm841, 16843009, 0
        %v850 = vsel %vm842, 16843009, 0
        %v851 = vsel %vm843, 16843009, 0
        %v852 = vsel %vm844, 16843009, 0
        %v853 = vsel %vm845, 16843009, 0
        %v854 = vsel %vm846, 16843009, 0
        %v855 = vsel %vm847, 16843009, 0
        %v856 = vsel %vm848, 16843009, 0
        %v857 = vunpack.c.0.s8 %v849
        %v858 = vunpack.c.0.s8 %v850
        %v859 = vunpack.c.1.s8 %v849
        %v860 = vunpack.c.1.s8 %v850
        %v861 = vunpack.c.2.s8 %v849
        %v862 = vunpack.c.2.s8 %v850
        %v863 = vunpack.c.3.s8 %v849
        %v864 = vunpack.c.3.s8 %v850
        %v865 = vunpack.c.0.s8 %v851
        %v866 = vunpack.c.0.s8 %v852
        %v867 = vunpack.c.1.s8 %v851
        %v868 = vunpack.c.1.s8 %v852
        %v869 = vunpack.c.2.s8 %v851
        %v870 = vunpack.c.2.s8 %v852
        %v871 = vunpack.c.3.s8 %v851
        %v872 = vunpack.c.3.s8 %v852
        %v873 = vunpack.c.0.s8 %v853
        %v874 = vunpack.c.0.s8 %v854
        %v875 = vunpack.c.1.s8 %v853
        %v876 = vunpack.c.1.s8 %v854
        %v877 = vunpack.c.2.s8 %v853
        %v878 = vunpack.c.2.s8 %v854
        %v879 = vunpack.c.3.s8 %v853
        %v880 = vunpack.c.3.s8 %v854
        %v881 = vunpack.c.0.s8 %v855
        %v882 = vunpack.c.0.s8 %v856
        %v883 = vunpack.c.1.s8 %v855
        %v884 = vunpack.c.1.s8 %v856
        %v885 = vunpack.c.2.s8 %v855
        %v886 = vunpack.c.2.s8 %v856
        %v887 = vunpack.c.3.s8 %v855
        %v888 = vunpack.c.3.s8 %v856
        %v889 = vpack.c.b16 %v858, %v857
        %v890 = vpack.c.b8 %v889, %v889
        %v891 = vpack.c.b16 %v860, %v859
        %v892 = vpack.c.b8 %v891, %v891
        %v893 = vpack.c.b16 %v862, %v861
        %v894 = vpack.c.b8 %v893, %v893
        %v895 = vpack.c.b16 %v864, %v863
        %v896 = vpack.c.b8 %v895, %v895
        %v897 = vpack.c.b16 %v866, %v865
        %v898 = vpack.c.b8 %v897, %v897
        %v899 = vpack.c.b16 %v868, %v867
        %v900 = vpack.c.b8 %v899, %v899
        %v901 = vpack.c.b16 %v870, %v869
        %v902 = vpack.c.b8 %v901, %v901
        %v903 = vpack.c.b16 %v872, %v871
        %v904 = vpack.c.b8 %v903, %v903
        %v905 = vpack.c.b16 %v874, %v873
        %v906 = vpack.c.b8 %v905, %v905
        %v907 = vpack.c.b16 %v876, %v875
        %v908 = vpack.c.b8 %v907, %v907
        %v909 = vpack.c.b16 %v878, %v877
        %v910 = vpack.c.b8 %v909, %v909
        %v911 = vpack.c.b16 %v880, %v879
        %v912 = vpack.c.b8 %v911, %v911
        %v913 = vpack.c.b16 %v882, %v881
        %v914 = vpack.c.b8 %v913, %v913
        %v915 = vpack.c.b16 %v884, %v883
        %v916 = vpack.c.b8 %v915, %v915
        %v917 = vpack.c.b16 %v886, %v885
        %v918 = vpack.c.b8 %v917, %v917
        %v919 = vpack.c.b16 %v888, %v887
        %v920 = vpack.c.b8 %v919, %v919
        %vm921 = vnez %v890
        %vm922 = vnez %v892
        %vm923 = vnez %v894
        %vm924 = vnez %v896
        %vm925 = vnez %v898
        %vm926 = vnez %v900
        %vm927 = vnez %v902
        %vm928 = vnez %v904
        %vm929 = vnez %v906
        %vm930 = vnez %v908
        %vm931 = vnez %v910
        %vm932 = vnez %v912
        %vm933 = vnez %v914
        %vm934 = vnez %v916
        %vm935 = vnez %v918
        %vm936 = vnez %v920
        %v937 = vsel %vm921, 16843009, 0
        %v938 = vsel %vm922, 16843009, 0
        %v939 = vsel %vm923, 16843009, 0
        %v940 = vsel %vm924, 16843009, 0
        %v941 = vsel %vm925, 16843009, 0
        %v942 = vsel %vm926, 16843009, 0
        %v943 = vsel %vm927, 16843009, 0
        %v944 = vsel %vm928, 16843009, 0
        %v945 = vsel %vm929, 16843009, 0
        %v946 = vsel %vm930, 16843009, 0
        %v947 = vsel %vm931, 16843009, 0
        %v948 = vsel %vm932, 16843009, 0
        %v949 = vsel %vm933, 16843009, 0
        %v950 = vsel %vm934, 16843009, 0
        %v951 = vsel %vm935, 16843009, 0
        %v952 = vsel %vm936, 16843009, 0
        %v953 = vunpack.c.0.s8 %v937
        %v954 = vunpack.c.1.s8 %v937
        %v955 = vunpack.c.0.s8 %v938
        %v956 = vunpack.c.1.s8 %v938
        %v957 = vunpack.c.0.s8 %v939
        %v958 = vunpack.c.1.s8 %v939
        %v959 = vunpack.c.0.s8 %v940
        %v960 = vunpack.c.1.s8 %v940
        %v961 = vunpack.c.0.s8 %v941
        %v962 = vunpack.c.1.s8 %v941
        %v963 = vunpack.c.0.s8 %v942
        %v964 = vunpack.c.1.s8 %v942
        %v965 = vunpack.c.0.s8 %v943
        %v966 = vunpack.c.1.s8 %v943
        %v967 = vunpack.c.0.s8 %v944
        %v968 = vunpack.c.1.s8 %v944
        %v969 = vunpack.c.0.s8 %v945
        %v970 = vunpack.c.1.s8 %v945
        %v971 = vunpack.c.0.s8 %v946
        %v972 = vunpack.c.1.s8 %v946
        %v973 = vunpack.c.0.s8 %v947
        %v974 = vunpack.c.1.s8 %v947
        %v975 = vunpack.c.0.s8 %v948
        %v976 = vunpack.c.1.s8 %v948
        %v977 = vunpack.c.0.s8 %v949
        %v978 = vunpack.c.1.s8 %v949
        %v979 = vunpack.c.0.s8 %v950
        %v980 = vunpack.c.1.s8 %v950
        %v981 = vunpack.c.0.s8 %v951
        %v982 = vunpack.c.1.s8 %v951
        %v983 = vunpack.c.0.s8 %v952
        %v984 = vunpack.c.1.s8 %v952
        %vm985 = vcmp.ne.s32.totalorder %v953, 0
        %vm986 = vcmp.ne.s32.totalorder %v954, 0
        %vm987 = vcmp.ne.s32.totalorder %v955, 0
        %vm988 = vcmp.ne.s32.totalorder %v956, 0
        %vm989 = vcmp.ne.s32.totalorder %v957, 0
        %vm990 = vcmp.ne.s32.totalorder %v958, 0
        %vm991 = vcmp.ne.s32.totalorder %v959, 0
        %vm992 = vcmp.ne.s32.totalorder %v960, 0
        %vm993 = vcmp.ne.s32.totalorder %v961, 0
        %vm994 = vcmp.ne.s32.totalorder %v962, 0
        %vm995 = vcmp.ne.s32.totalorder %v963, 0
        %vm996 = vcmp.ne.s32.totalorder %v964, 0
        %vm997 = vcmp.ne.s32.totalorder %v965, 0
        %vm998 = vcmp.ne.s32.totalorder %v966, 0
        %vm999 = vcmp.ne.s32.totalorder %v967, 0
        %vm1000 = vcmp.ne.s32.totalorder %v968, 0
        %vm1001 = vcmp.ne.s32.totalorder %v969, 0
        %vm1002 = vcmp.ne.s32.totalorder %v970, 0
        %vm1003 = vcmp.ne.s32.totalorder %v971, 0
        %vm1004 = vcmp.ne.s32.totalorder %v972, 0
        %vm1005 = vcmp.ne.s32.totalorder %v973, 0
        %vm1006 = vcmp.ne.s32.totalorder %v974, 0
        %vm1007 = vcmp.ne.s32.totalorder %v975, 0
        %vm1008 = vcmp.ne.s32.totalorder %v976, 0
        %vm1009 = vcmp.ne.s32.totalorder %v977, 0
        %vm1010 = vcmp.ne.s32.totalorder %v978, 0
        %vm1011 = vcmp.ne.s32.totalorder %v979, 0
        %vm1012 = vcmp.ne.s32.totalorder %v980, 0
        %vm1013 = vcmp.ne.s32.totalorder %v981, 0
        %vm1014 = vcmp.ne.s32.totalorder %v982, 0
        %vm1015 = vcmp.ne.s32.totalorder %v983, 0
        %vm1016 = vcmp.ne.s32.totalorder %v984, 0
        %v1017 = vsel %vm985, -1e+30, %v763
        %v1018 = vsel %vm986, -1e+30, %v765
        %v1019 = vsel %vm987, -1e+30, %v767
        %v1020 = vsel %vm988, -1e+30, %v769
        %v1021 = vsel %vm989, -1e+30, %v773
        %v1022 = vsel %vm990, -1e+30, %v775
        %v1023 = vsel %vm991, -1e+30, %v777
        %v1024 = vsel %vm992, -1e+30, %v779
        %v1025 = vsel %vm993, -1e+30, %v783
        %v1026 = vsel %vm994, -1e+30, %v785
        %v1027 = vsel %vm995, -1e+30, %v787
        %v1028 = vsel %vm996, -1e+30, %v789
        %v1029 = vsel %vm997, -1e+30, %v793
        %v1030 = vsel %vm998, -1e+30, %v795
        %v1031 = vsel %vm999, -1e+30, %v797
        %v1032 = vsel %vm1000, -1e+30, %v799
        %v1033 = vsel %vm1001, -1e+30, %v803
        %v1034 = vsel %vm1002, -1e+30, %v805
        %v1035 = vsel %vm1003, -1e+30, %v807
        %v1036 = vsel %vm1004, -1e+30, %v809
        %v1037 = vsel %vm1005, -1e+30, %v813
        %v1038 = vsel %vm1006, -1e+30, %v815
        %v1039 = vsel %vm1007, -1e+30, %v817
        %v1040 = vsel %vm1008, -1e+30, %v819
        %v1041 = vsel %vm1009, -1e+30, %v823
        %v1042 = vsel %vm1010, -1e+30, %v825
        %v1043 = vsel %vm1011, -1e+30, %v827
        %v1044 = vsel %vm1012, -1e+30, %v829
        %v1045 = vsel %vm1013, -1e+30, %v833
        %v1046 = vsel %vm1014, -1e+30, %v835
        %v1047 = vsel %vm1015, -1e+30, %v837
        %v1048 = vsel %vm1016, -1e+30, %v839
        %v1049 = vld [vmem:[#allocation3] sm:$0xff]
        %v1050 = vld [vmem:[#allocation3 + $0x8] sm:$0xff]
        %v1051 = vld [vmem:[#allocation3 + $0x10] sm:$0xff]
        %v1052 = vld [vmem:[#allocation3 + $0x18] sm:$0xff]
        %v1053 = vld [vmem:[#allocation3 + $0x20] sm:$0xff]
        %v1054 = vld [vmem:[#allocation3 + $0x28] sm:$0xff]
        %v1055 = vld [vmem:[#allocation3 + $0x30] sm:$0xff]
        %v1056 = vld [vmem:[#allocation3 + $0x38] sm:$0xff]
        %v1057 = vld [vmem:[#allocation3 + $0x40] sm:$0xff]
        %v1058 = vld [vmem:[#allocation3 + $0x48] sm:$0xff]
        %v1059 = vld [vmem:[#allocation3 + $0x50] sm:$0xff]
        %v1060 = vld [vmem:[#allocation3 + $0x58] sm:$0xff]
        %v1061 = vld [vmem:[#allocation3 + $0x60] sm:$0xff]
        %v1062 = vld [vmem:[#allocation3 + $0x68] sm:$0xff]
        %v1063 = vld [vmem:[#allocation3 + $0x70] sm:$0xff]
        %v1064 = vld [vmem:[#allocation3 + $0x78] sm:$0xff]
        %v1065 = vmax.f32 %v1017, %v1018
        %1066 = vmax.xlane.f32.xlu0 %v1065
        %v1067 = vpop.xlane.xlu0 %1066
        %v1068 = vmax.f32 %v1019, %v1020
        %1069 = vmax.xlane.f32.xlu0 %v1068
        %v1070 = vpop.xlane.xlu0 %1069
        %v1071 = vmax.f32 %v1021, %v1022
        %1072 = vmax.xlane.f32.xlu0 %v1071
        %v1073 = vpop.xlane.xlu0 %1072
        %v1074 = vmax.f32 %v1023, %v1024
        %1075 = vmax.xlane.f32.xlu0 %v1074
        %v1076 = vpop.xlane.xlu0 %1075
        %v1077 = vmax.f32 %v1025, %v1026
        %1078 = vmax.xlane.f32.xlu0 %v1077
        %v1079 = vpop.xlane.xlu0 %1078
        %v1080 = vmax.f32 %v1027, %v1028
        %1081 = vmax.xlane.f32.xlu0 %v1080
        %v1082 = vpop.xlane.xlu0 %1081
        %v1083 = vmax.f32 %v1029, %v1030
        %1084 = vmax.xlane.f32.xlu0 %v1083
        %v1085 = vpop.xlane.xlu0 %1084
        %v1086 = vmax.f32 %v1031, %v1032
        %1087 = vmax.xlane.f32.xlu0 %v1086
        %v1088 = vpop.xlane.xlu0 %1087
        %v1089 = vmax.f32 %v1033, %v1034
        %1090 = vmax.xlane.f32.xlu0 %v1089
        %v1091 = vpop.xlane.xlu0 %1090
        %v1092 = vmax.f32 %v1035, %v1036
        %1093 = vmax.xlane.f32.xlu0 %v1092
        %v1094 = vpop.xlane.xlu0 %1093
        %v1095 = vmax.f32 %v1037, %v1038
        %1096 = vmax.xlane.f32.xlu0 %v1095
        %v1097 = vpop.xlane.xlu0 %1096
        %v1098 = vmax.f32 %v1039, %v1040
        %1099 = vmax.xlane.f32.xlu0 %v1098
        %v1100 = vpop.xlane.xlu0 %1099
        %v1101 = vmax.f32 %v1041, %v1042
        %1102 = vmax.xlane.f32.xlu0 %v1101
        %v1103 = vpop.xlane.xlu0 %1102
        %v1104 = vmax.f32 %v1043, %v1044
        %1105 = vmax.xlane.f32.xlu0 %v1104
        %v1106 = vpop.xlane.xlu0 %1105
        %v1107 = vmax.f32 %v1045, %v1046
        %1108 = vmax.xlane.f32.xlu0 %v1107
        %v1109 = vpop.xlane.xlu0 %1108
        %v1110 = vmax.f32 %v1047, %v1048
        %1111 = vmax.xlane.f32.xlu0 %v1110
        %v1112 = vpop.xlane.xlu0 %1111
        %v1113 = vmax.f32 %v1049, %v1067
        %v1114 = vmax.f32 %v1050, %v1070
        %v1115 = vmax.f32 %v1051, %v1073
        %v1116 = vmax.f32 %v1052, %v1076
        %v1117 = vmax.f32 %v1053, %v1079
        %v1118 = vmax.f32 %v1054, %v1082
        %v1119 = vmax.f32 %v1055, %v1085
        %v1120 = vmax.f32 %v1056, %v1088
        %v1121 = vmax.f32 %v1057, %v1091
        %v1122 = vmax.f32 %v1058, %v1094
        %v1123 = vmax.f32 %v1059, %v1097
        %v1124 = vmax.f32 %v1060, %v1100
        %v1125 = vmax.f32 %v1061, %v1103
        %v1126 = vmax.f32 %v1062, %v1106
        %v1127 = vmax.f32 %v1063, %v1109
        %v1128 = vmax.f32 %v1064, %v1112
        %v1129 = vsub.f32 %v1049, %v1113
        %v1130 = vsub.f32 %v1050, %v1114
        %v1131 = vsub.f32 %v1051, %v1115
        %v1132 = vsub.f32 %v1052, %v1116
        %v1133 = vsub.f32 %v1053, %v1117
        %v1134 = vsub.f32 %v1054, %v1118
        %v1135 = vsub.f32 %v1055, %v1119
        %v1136 = vsub.f32 %v1056, %v1120
        %v1137 = vsub.f32 %v1057, %v1121
        %v1138 = vsub.f32 %v1058, %v1122
        %v1139 = vsub.f32 %v1059, %v1123
        %v1140 = vsub.f32 %v1060, %v1124
        %v1141 = vsub.f32 %v1061, %v1125
        %v1142 = vsub.f32 %v1062, %v1126
        %v1143 = vsub.f32 %v1063, %v1127
        %v1144 = vsub.f32 %v1064, %v1128
        %v1145 = vmul.f32 %v1129, 1.442695
        %v1146 = vpow.pop %v1145
        %v1147 = vmul.f32 %v1130, 1.442695
        %v1148 = vpow.pop %v1147
        %v1149 = vmul.f32 %v1131, 1.442695
        %v1150 = vpow.pop %v1149
        %v1151 = vmul.f32 %v1132, 1.442695
        %v1152 = vpow.pop %v1151
        %v1153 = vmul.f32 %v1133, 1.442695
        %v1154 = vpow.pop %v1153
        %v1155 = vmul.f32 %v1134, 1.442695
        %v1156 = vpow.pop %v1155
        %v1157 = vmul.f32 %v1135, 1.442695
        %v1158 = vpow.pop %v1157
        %v1159 = vmul.f32 %v1136, 1.442695
        %v1160 = vpow.pop %v1159
        %v1161 = vmul.f32 %v1137, 1.442695
        %v1162 = vpow.pop %v1161
        %v1163 = vmul.f32 %v1138, 1.442695
        %v1164 = vpow.pop %v1163
        %v1165 = vmul.f32 %v1139, 1.442695
        %v1166 = vpow.pop %v1165
        %v1167 = vmul.f32 %v1140, 1.442695
        %v1168 = vpow.pop %v1167
        %v1169 = vmul.f32 %v1141, 1.442695
        %v1170 = vpow.pop %v1169
        %v1171 = vmul.f32 %v1142, 1.442695
        %v1172 = vpow.pop %v1171
        %v1173 = vmul.f32 %v1143, 1.442695
        %v1174 = vpow.pop %v1173
        %v1175 = vmul.f32 %v1144, 1.442695
        %v1176 = vpow.pop %v1175
        %1178 = vset.pattern.permute.xlu0 0
        %1179 = vperm.xlu0 %1178, %v1113
        %v1180 = vpop.permute.xlu0 %1179
        %1183 = vset.pattern.permute.xlu0 0
        %1184 = vperm.xlu0 %1183, %v1114
        %v1185 = vpop.permute.xlu0 %1184
        %1188 = vset.pattern.permute.xlu0 0
        %1189 = vperm.xlu0 %1188, %v1115
        %v1190 = vpop.permute.xlu0 %1189
        %1193 = vset.pattern.permute.xlu0 0
        %1194 = vperm.xlu0 %1193, %v1116
        %v1195 = vpop.permute.xlu0 %1194
        %1198 = vset.pattern.permute.xlu0 0
        %1199 = vperm.xlu0 %1198, %v1117
        %v1200 = vpop.permute.xlu0 %1199
        %1203 = vset.pattern.permute.xlu0 0
        %1204 = vperm.xlu0 %1203, %v1118
        %v1205 = vpop.permute.xlu0 %1204
        %1208 = vset.pattern.permute.xlu0 0
        %1209 = vperm.xlu0 %1208, %v1119
        %v1210 = vpop.permute.xlu0 %1209
        %1213 = vset.pattern.permute.xlu0 0
        %1214 = vperm.xlu0 %1213, %v1120
        %v1215 = vpop.permute.xlu0 %1214
        %1218 = vset.pattern.permute.xlu0 0
        %1219 = vperm.xlu0 %1218, %v1121
        %v1220 = vpop.permute.xlu0 %1219
        %1223 = vset.pattern.permute.xlu0 0
        %1224 = vperm.xlu0 %1223, %v1122
        %v1225 = vpop.permute.xlu0 %1224
        %1228 = vset.pattern.permute.xlu0 0
        %1229 = vperm.xlu0 %1228, %v1123
        %v1230 = vpop.permute.xlu0 %1229
        %1233 = vset.pattern.permute.xlu0 0
        %1234 = vperm.xlu0 %1233, %v1124
        %v1235 = vpop.permute.xlu0 %1234
        %1238 = vset.pattern.permute.xlu0 0
        %1239 = vperm.xlu0 %1238, %v1125
        %v1240 = vpop.permute.xlu0 %1239
        %1243 = vset.pattern.permute.xlu0 0
        %1244 = vperm.xlu0 %1243, %v1126
        %v1245 = vpop.permute.xlu0 %1244
        %1248 = vset.pattern.permute.xlu0 0
        %1249 = vperm.xlu0 %1248, %v1127
        %v1250 = vpop.permute.xlu0 %1249
        %1253 = vset.pattern.permute.xlu0 0
        %1254 = vperm.xlu0 %1253, %v1128
        %v1255 = vpop.permute.xlu0 %1254
        %v1257 = vsub.f32 %v1017, %v1180
        %v1258 = vsub.f32 %v1018, %v1180
        %v1259 = vsub.f32 %v1019, %v1185
        %v1260 = vsub.f32 %v1020, %v1185
        %v1261 = vsub.f32 %v1021, %v1190
        %v1262 = vsub.f32 %v1022, %v1190
        %v1263 = vsub.f32 %v1023, %v1195
        %v1264 = vsub.f32 %v1024, %v1195
        %v1265 = vsub.f32 %v1025, %v1200
        %v1266 = vsub.f32 %v1026, %v1200
        %v1267 = vsub.f32 %v1027, %v1205
        %v1268 = vsub.f32 %v1028, %v1205
        %v1269 = vsub.f32 %v1029, %v1210
        %v1270 = vsub.f32 %v1030, %v1210
        %v1271 = vsub.f32 %v1031, %v1215
        %v1272 = vsub.f32 %v1032, %v1215
        %v1273 = vsub.f32 %v1033, %v1220
        %v1274 = vsub.f32 %v1034, %v1220
        %v1275 = vsub.f32 %v1035, %v1225
        %v1276 = vsub.f32 %v1036, %v1225
        %v1277 = vsub.f32 %v1037, %v1230
        %v1278 = vsub.f32 %v1038, %v1230
        %v1279 = vsub.f32 %v1039, %v1235
        %v1280 = vsub.f32 %v1040, %v1235
        %v1281 = vsub.f32 %v1041, %v1240
        %v1282 = vsub.f32 %v1042, %v1240
        %v1283 = vsub.f32 %v1043, %v1245
        %v1284 = vsub.f32 %v1044, %v1245
        %v1285 = vsub.f32 %v1045, %v1250
        %v1286 = vsub.f32 %v1046, %v1250
        %v1287 = vsub.f32 %v1047, %v1255
        %v1288 = vsub.f32 %v1048, %v1255
        %v1289 = vmul.f32 %v1257, 1.442695
        %v1290 = vpow.pop %v1289
        %v1291 = vmul.f32 %v1258, 1.442695
        %v1292 = vpow.pop %v1291
        %v1293 = vmul.f32 %v1259, 1.442695
        %v1294 = vpow.pop %v1293
        %v1295 = vmul.f32 %v1260, 1.442695
        %v1296 = vpow.pop %v1295
        %v1297 = vmul.f32 %v1261, 1.442695
        %v1298 = vpow.pop %v1297
        %v1299 = vmul.f32 %v1262, 1.442695
        %v1300 = vpow.pop %v1299
        %v1301 = vmul.f32 %v1263, 1.442695
        %v1302 = vpow.pop %v1301
        %v1303 = vmul.f32 %v1264, 1.442695
        %v1304 = vpow.pop %v1303
        %v1305 = vmul.f32 %v1265, 1.442695
        %v1306 = vpow.pop %v1305
        %v1307 = vmul.f32 %v1266, 1.442695
        %v1308 = vpow.pop %v1307
        %v1309 = vmul.f32 %v1267, 1.442695
        %v1310 = vpow.pop %v1309
        %v1311 = vmul.f32 %v1268, 1.442695
        %v1312 = vpow.pop %v1311
        %v1313 = vmul.f32 %v1269, 1.442695
        %v1314 = vpow.pop %v1313
        %v1315 = vmul.f32 %v1270, 1.442695
        %v1316 = vpow.pop %v1315
        %v1317 = vmul.f32 %v1271, 1.442695
        %v1318 = vpow.pop %v1317
        %v1319 = vmul.f32 %v1272, 1.442695
        %v1320 = vpow.pop %v1319
        %v1321 = vmul.f32 %v1273, 1.442695
        %v1322 = vpow.pop %v1321
        %v1323 = vmul.f32 %v1274, 1.442695
        %v1324 = vpow.pop %v1323
        %v1325 = vmul.f32 %v1275, 1.442695
        %v1326 = vpow.pop %v1325
        %v1327 = vmul.f32 %v1276, 1.442695
        %v1328 = vpow.pop %v1327
        %v1329 = vmul.f32 %v1277, 1.442695
        %v1330 = vpow.pop %v1329
        %v1331 = vmul.f32 %v1278, 1.442695
        %v1332 = vpow.pop %v1331
        %v1333 = vmul.f32 %v1279, 1.442695
        %v1334 = vpow.pop %v1333
        %v1335 = vmul.f32 %v1280, 1.442695
        %v1336 = vpow.pop %v1335
        %v1337 = vmul.f32 %v1281, 1.442695
        %v1338 = vpow.pop %v1337
        %v1339 = vmul.f32 %v1282, 1.442695
        %v1340 = vpow.pop %v1339
        %v1341 = vmul.f32 %v1283, 1.442695
        %v1342 = vpow.pop %v1341
        %v1343 = vmul.f32 %v1284, 1.442695
        %v1344 = vpow.pop %v1343
        %v1345 = vmul.f32 %v1285, 1.442695
        %v1346 = vpow.pop %v1345
        %v1347 = vmul.f32 %v1286, 1.442695
        %v1348 = vpow.pop %v1347
        %v1349 = vmul.f32 %v1287, 1.442695
        %v1350 = vpow.pop %v1349
        %v1351 = vmul.f32 %v1288, 1.442695
        %v1352 = vpow.pop %v1351
        %v1353 = vld [vmem:[#allocation4] sm:$0xff]
        %v1354 = vld [vmem:[#allocation4 + $0x8] sm:$0xff]
        %v1355 = vld [vmem:[#allocation4 + $0x10] sm:$0xff]
        %v1356 = vld [vmem:[#allocation4 + $0x18] sm:$0xff]
        %v1357 = vld [vmem:[#allocation4 + $0x20] sm:$0xff]
        %v1358 = vld [vmem:[#allocation4 + $0x28] sm:$0xff]
        %v1359 = vld [vmem:[#allocation4 + $0x30] sm:$0xff]
        %v1360 = vld [vmem:[#allocation4 + $0x38] sm:$0xff]
        %v1361 = vld [vmem:[#allocation4 + $0x40] sm:$0xff]
        %v1362 = vld [vmem:[#allocation4 + $0x48] sm:$0xff]
        %v1363 = vld [vmem:[#allocation4 + $0x50] sm:$0xff]
        %v1364 = vld [vmem:[#allocation4 + $0x58] sm:$0xff]
        %v1365 = vld [vmem:[#allocation4 + $0x60] sm:$0xff]
        %v1366 = vld [vmem:[#allocation4 + $0x68] sm:$0xff]
        %v1367 = vld [vmem:[#allocation4 + $0x70] sm:$0xff]
        %v1368 = vld [vmem:[#allocation4 + $0x78] sm:$0xff]
        %v1369 = vmul.f32 %v1146, %v1353
        %v1370 = vmul.f32 %v1148, %v1354
        %v1371 = vmul.f32 %v1150, %v1355
        %v1372 = vmul.f32 %v1152, %v1356
        %v1373 = vmul.f32 %v1154, %v1357
        %v1374 = vmul.f32 %v1156, %v1358
        %v1375 = vmul.f32 %v1158, %v1359
        %v1376 = vmul.f32 %v1160, %v1360
        %v1377 = vmul.f32 %v1162, %v1361
        %v1378 = vmul.f32 %v1164, %v1362
        %v1379 = vmul.f32 %v1166, %v1363
        %v1380 = vmul.f32 %v1168, %v1364
        %v1381 = vmul.f32 %v1170, %v1365
        %v1382 = vmul.f32 %v1172, %v1366
        %v1383 = vmul.f32 %v1174, %v1367
        %v1384 = vmul.f32 %v1176, %v1368
        %v1385 = vadd.f32 %v1290, %v1292
        %1386 = vadd.xlane.f32.xlu0 %v1385
        %v1387 = vpop.xlane.xlu0 %1386
        %v1388 = vadd.f32 %v1294, %v1296
        %1389 = vadd.xlane.f32.xlu0 %v1388
        %v1390 = vpop.xlane.xlu0 %1389
        %v1391 = vadd.f32 %v1298, %v1300
        %1392 = vadd.xlane.f32.xlu0 %v1391
        %v1393 = vpop.xlane.xlu0 %1392
        %v1394 = vadd.f32 %v1302, %v1304
        %1395 = vadd.xlane.f32.xlu0 %v1394
        %v1396 = vpop.xlane.xlu0 %1395
        %v1397 = vadd.f32 %v1306, %v1308
        %1398 = vadd.xlane.f32.xlu0 %v1397
        %v1399 = vpop.xlane.xlu0 %1398
        %v1400 = vadd.f32 %v1310, %v1312
        %1401 = vadd.xlane.f32.xlu0 %v1400
        %v1402 = vpop.xlane.xlu0 %1401
        %v1403 = vadd.f32 %v1314, %v1316
        %1404 = vadd.xlane.f32.xlu0 %v1403
        %v1405 = vpop.xlane.xlu0 %1404
        %v1406 = vadd.f32 %v1318, %v1320
        %1407 = vadd.xlane.f32.xlu0 %v1406
        %v1408 = vpop.xlane.xlu0 %1407
        %v1409 = vadd.f32 %v1322, %v1324
        %1410 = vadd.xlane.f32.xlu0 %v1409
        %v1411 = vpop.xlane.xlu0 %1410
        %v1412 = vadd.f32 %v1326, %v1328
        %1413 = vadd.xlane.f32.xlu0 %v1412
        %v1414 = vpop.xlane.xlu0 %1413
        %v1415 = vadd.f32 %v1330, %v1332
        %1416 = vadd.xlane.f32.xlu0 %v1415
        %v1417 = vpop.xlane.xlu0 %1416
        %v1418 = vadd.f32 %v1334, %v1336
        %1419 = vadd.xlane.f32.xlu0 %v1418
        %v1420 = vpop.xlane.xlu0 %1419
        %v1421 = vadd.f32 %v1338, %v1340
        %1422 = vadd.xlane.f32.xlu0 %v1421
        %v1423 = vpop.xlane.xlu0 %1422
        %v1424 = vadd.f32 %v1342, %v1344
        %1425 = vadd.xlane.f32.xlu0 %v1424
        %v1426 = vpop.xlane.xlu0 %1425
        %v1427 = vadd.f32 %v1346, %v1348
        %1428 = vadd.xlane.f32.xlu0 %v1427
        %v1429 = vpop.xlane.xlu0 %1428
        %v1430 = vadd.f32 %v1350, %v1352
        %1431 = vadd.xlane.f32.xlu0 %v1430
        %v1432 = vpop.xlane.xlu0 %1431
        %v1433 = vadd.f32 %v1369, %v1387
        %v1434 = vadd.f32 %v1370, %v1390
        %v1435 = vadd.f32 %v1371, %v1393
        %v1436 = vadd.f32 %v1372, %v1396
        %v1437 = vadd.f32 %v1373, %v1399
        %v1438 = vadd.f32 %v1374, %v1402
        %v1439 = vadd.f32 %v1375, %v1405
        %v1440 = vadd.f32 %v1376, %v1408
        %v1441 = vadd.f32 %v1377, %v1411
        %v1442 = vadd.f32 %v1378, %v1414
        %v1443 = vadd.f32 %v1379, %v1417
        %v1444 = vadd.f32 %v1380, %v1420
        %v1445 = vadd.f32 %v1381, %v1423
        %v1446 = vadd.f32 %v1382, %v1426
        %v1447 = vadd.f32 %v1383, %v1429
        %v1448 = vadd.f32 %v1384, %v1432
        %vm1449 = vcmask 7168
        %1450 = vst.msk [vmem:[#allocation4] sm:$0xff] %vm1449, %v1433
        %1451 = vst.msk [vmem:[#allocation4 + $0x8] sm:$0xff] %vm1449, %v1434
        %1452 = vst.msk [vmem:[#allocation4 + $0x10] sm:$0xff] %vm1449, %v1435
        %1453 = vst.msk [vmem:[#allocation4 + $0x18] sm:$0xff] %vm1449, %v1436
        %1454 = vst.msk [vmem:[#allocation4 + $0x20] sm:$0xff] %vm1449, %v1437
        %1455 = vst.msk [vmem:[#allocation4 + $0x28] sm:$0xff] %vm1449, %v1438
        %1456 = vst.msk [vmem:[#allocation4 + $0x30] sm:$0xff] %vm1449, %v1439
        %1457 = vst.msk [vmem:[#allocation4 + $0x38] sm:$0xff] %vm1449, %v1440
        %1458 = vst.msk [vmem:[#allocation4 + $0x40] sm:$0xff] %vm1449, %v1441
        %1459 = vst.msk [vmem:[#allocation4 + $0x48] sm:$0xff] %vm1449, %v1442
        %1460 = vst.msk [vmem:[#allocation4 + $0x50] sm:$0xff] %vm1449, %v1443
        %1461 = vst.msk [vmem:[#allocation4 + $0x58] sm:$0xff] %vm1449, %v1444
        %1462 = vst.msk [vmem:[#allocation4 + $0x60] sm:$0xff] %vm1449, %v1445
        %1463 = vst.msk [vmem:[#allocation4 + $0x68] sm:$0xff] %vm1449, %v1446
        %1464 = vst.msk [vmem:[#allocation4 + $0x70] sm:$0xff] %vm1449, %v1447
        %1465 = vst.msk [vmem:[#allocation4 + $0x78] sm:$0xff] %vm1449, %v1448
        %v1466 = vld [vmem:[#allocation5] sm:$0xff]
        %v1467 = vld [vmem:[#allocation5 + $0x8] sm:$0xff]
        %v1468 = vld [vmem:[#allocation5 + $0x10] sm:$0xff]
        %v1469 = vld [vmem:[#allocation5 + $0x18] sm:$0xff]
        %v1470 = vld [vmem:[#allocation5 + $0x20] sm:$0xff]
        %v1471 = vld [vmem:[#allocation5 + $0x28] sm:$0xff]
        %v1472 = vld [vmem:[#allocation5 + $0x30] sm:$0xff]
        %v1473 = vld [vmem:[#allocation5 + $0x38] sm:$0xff]
        %v1474 = vld [vmem:[#allocation5 + $0x40] sm:$0xff]
        %v1475 = vld [vmem:[#allocation5 + $0x48] sm:$0xff]
        %v1476 = vld [vmem:[#allocation5 + $0x50] sm:$0xff]
        %v1477 = vld [vmem:[#allocation5 + $0x58] sm:$0xff]
        %v1478 = vld [vmem:[#allocation5 + $0x60] sm:$0xff]
        %v1479 = vld [vmem:[#allocation5 + $0x68] sm:$0xff]
        %v1480 = vld [vmem:[#allocation5 + $0x70] sm:$0xff]
        %v1481 = vld [vmem:[#allocation5 + $0x78] sm:$0xff]
        %1483 = vset.pattern.permute.xlu0 0
        %1484 = vperm.xlu0 %1483, %v1146
        %v1485 = vpop.permute.xlu0 %1484
        %1488 = vset.pattern.permute.xlu0 0
        %1489 = vperm.xlu0 %1488, %v1148
        %v1490 = vpop.permute.xlu0 %1489
        %1493 = vset.pattern.permute.xlu0 0
        %1494 = vperm.xlu0 %1493, %v1150
        %v1495 = vpop.permute.xlu0 %1494
        %1498 = vset.pattern.permute.xlu0 0
        %1499 = vperm.xlu0 %1498, %v1152
        %v1500 = vpop.permute.xlu0 %1499
        %1503 = vset.pattern.permute.xlu0 0
        %1504 = vperm.xlu0 %1503, %v1154
        %v1505 = vpop.permute.xlu0 %1504
        %1508 = vset.pattern.permute.xlu0 0
        %1509 = vperm.xlu0 %1508, %v1156
        %v1510 = vpop.permute.xlu0 %1509
        %1513 = vset.pattern.permute.xlu0 0
        %1514 = vperm.xlu0 %1513, %v1158
        %v1515 = vpop.permute.xlu0 %1514
        %1518 = vset.pattern.permute.xlu0 0
        %1519 = vperm.xlu0 %1518, %v1160
        %v1520 = vpop.permute.xlu0 %1519
        %1523 = vset.pattern.permute.xlu0 0
        %1524 = vperm.xlu0 %1523, %v1162
        %v1525 = vpop.permute.xlu0 %1524
        %1528 = vset.pattern.permute.xlu0 0
        %1529 = vperm.xlu0 %1528, %v1164
        %v1530 = vpop.permute.xlu0 %1529
        %1533 = vset.pattern.permute.xlu0 0
        %1534 = vperm.xlu0 %1533, %v1166
        %v1535 = vpop.permute.xlu0 %1534
        %1538 = vset.pattern.permute.xlu0 0
        %1539 = vperm.xlu0 %1538, %v1168
        %v1540 = vpop.permute.xlu0 %1539
        %1543 = vset.pattern.permute.xlu0 0
        %1544 = vperm.xlu0 %1543, %v1170
        %v1545 = vpop.permute.xlu0 %1544
        %1548 = vset.pattern.permute.xlu0 0
        %1549 = vperm.xlu0 %1548, %v1172
        %v1550 = vpop.permute.xlu0 %1549
        %1553 = vset.pattern.permute.xlu0 0
        %1554 = vperm.xlu0 %1553, %v1174
        %v1555 = vpop.permute.xlu0 %1554
        %1558 = vset.pattern.permute.xlu0 0
        %1559 = vperm.xlu0 %1558, %v1176
        %v1560 = vpop.permute.xlu0 %1559
        %v1562 = vmul.f32 %v1485, %v1466
        %v1563 = vmul.f32 %v1490, %v1467
        %v1564 = vmul.f32 %v1495, %v1468
        %v1565 = vmul.f32 %v1500, %v1469
        %v1566 = vmul.f32 %v1505, %v1470
        %v1567 = vmul.f32 %v1510, %v1471
        %v1568 = vmul.f32 %v1515, %v1472
        %v1569 = vmul.f32 %v1520, %v1473
        %v1570 = vmul.f32 %v1525, %v1474
        %v1571 = vmul.f32 %v1530, %v1475
        %v1572 = vmul.f32 %v1535, %v1476
        %v1573 = vmul.f32 %v1540, %v1477
        %v1574 = vmul.f32 %v1545, %v1478
        %v1575 = vmul.f32 %v1550, %v1479
        %v1576 = vmul.f32 %v1555, %v1480
        %v1577 = vmul.f32 %v1560, %v1481
        %v1578 = vpack.c.bf16 %v1294, %v1290
        %v1579 = vpack.c.bf16 %v1296, %v1292
        %v1580 = vpack.c.bf16 %v1302, %v1298
        %v1581 = vpack.c.bf16 %v1304, %v1300
        %v1582 = vpack.c.bf16 %v1310, %v1306
        %v1583 = vpack.c.bf16 %v1312, %v1308
        %v1584 = vpack.c.bf16 %v1318, %v1314
        %v1585 = vpack.c.bf16 %v1320, %v1316
        %v1586 = vpack.c.bf16 %v1326, %v1322
        %v1587 = vpack.c.bf16 %v1328, %v1324
        %v1588 = vpack.c.bf16 %v1334, %v1330
        %v1589 = vpack.c.bf16 %v1336, %v1332
        %v1590 = vpack.c.bf16 %v1342, %v1338
        %v1591 = vpack.c.bf16 %v1344, %v1340
        %v1592 = vpack.c.bf16 %v1350, %v1346
        %v1593 = vpack.c.bf16 %v1352, %v1348
        %1594 = vmatprep.subr.bf16.mxu0 0
        %1595 = vmatpush1.bf16.msra.mxu0 %v631
        %1596 = vmatprep.subr.bf16.mxu0 0
        %1597 = vmatpush1.bf16.msra.mxu0 %v632
        %1598 = vmatprep.subr.bf16.mxu0 0
        %1599 = vmatpush1.bf16.msra.mxu0 %v633
        %1600 = vmatprep.subr.bf16.mxu0 0
        %1601 = vmatpush1.bf16.msra.mxu0 %v634
        %1602 = vmatprep.subr.bf16.mxu0 0
        %1603 = vmatpush1.bf16.msra.mxu0 %v635
        %1604 = vmatprep.subr.bf16.mxu0 0
        %1605 = vmatpush1.bf16.msra.mxu0 %v636
        %1606 = vmatprep.subr.bf16.mxu0 0
        %1607 = vmatpush1.bf16.msra.mxu0 %v637
        %1608 = vmatprep.subr.bf16.mxu0 0
        %1609 = vmatpush1.bf16.msra.mxu0 %v638
        %1610 = vmatprep.subr.bf16.mxu0 0
        %1611 = vmatpush1.bf16.msra.mxu0 %v639
        %1612 = vmatprep.subr.bf16.mxu0 0
        %1613 = vmatpush1.bf16.msra.mxu0 %v640
        %1614 = vmatprep.subr.bf16.mxu0 0
        %1615 = vmatpush1.bf16.msra.mxu0 %v641
        %1616 = vmatprep.subr.bf16.mxu0 0
        %1617 = vmatpush1.bf16.msra.mxu0 %v642
        %1618 = vmatprep.subr.bf16.mxu0 0
        %1619 = vmatpush1.bf16.msra.mxu0 %v643
        %1620 = vmatprep.subr.bf16.mxu0 0
        %1621 = vmatpush1.bf16.msra.mxu0 %v644
        %1622 = vmatprep.subr.bf16.mxu0 0
        %1623 = vmatpush1.bf16.msra.mxu0 %v645
        %1624 = vmatprep.subr.bf16.mxu0 0
        %1625 = vmatpush1.bf16.msra.mxu0 %v646
        %1626 = vmatprep.mubr.bf16.mxu0 %v1579
        %1627 = vmatmul.mubr.bf16.gmra.mrb[0].mxu0 %v1578
        %v1628 = vpop.f32.mrb[0].mxu0
        %v1629 = vadd.f32 0.0, %v1628
        %v1630 = vpop.f32.mrb[0].mxu0
        %v1631 = vpop.f32.mrb[0].mxu0
        %v1632 = vadd.f32 0.0, %v1631
        %v1633 = vpop.f32.mrb[0].mxu0
        %1634 = vmatprep.mubr.bf16.mxu0 %v1581
        %1635 = vmatmul.mubr.bf16.gmra.mrb[0].mxu0 %v1580
        %v1636 = vpop.f32.mrb[0].mxu0
        %v1637 = vadd.f32 0.0, %v1636
        %v1638 = vpop.f32.mrb[0].mxu0
        %v1639 = vpop.f32.mrb[0].mxu0
        %v1640 = vadd.f32 0.0, %v1639
        %v1641 = vpop.f32.mrb[0].mxu0
        %1642 = vmatprep.mubr.bf16.mxu0 %v1583
        %1643 = vmatmul.mubr.bf16.gmra.mrb[0].mxu0 %v1582
        %v1644 = vpop.f32.mrb[0].mxu0
        %v1645 = vadd.f32 0.0, %v1644
        %v1646 = vpop.f32.mrb[0].mxu0
        %v1647 = vpop.f32.mrb[0].mxu0
        %v1648 = vadd.f32 0.0, %v1647
        %v1649 = vpop.f32.mrb[0].mxu0
        %1650 = vmatprep.mubr.bf16.mxu0 %v1585
        %1651 = vmatmul.mubr.bf16.gmra.mrb[0].mxu0 %v1584
        %v1652 = vpop.f32.mrb[0].mxu0
        %v1653 = vadd.f32 0.0, %v1652
        %v1654 = vpop.f32.mrb[0].mxu0
        %v1655 = vpop.f32.mrb[0].mxu0
        %v1656 = vadd.f32 0.0, %v1655
        %v1657 = vpop.f32.mrb[0].mxu0
        %1658 = vmatprep.mubr.bf16.mxu0 %v1587
        %1659 = vmatmul.mubr.bf16.gmra.mrb[0].mxu0 %v1586
        %v1660 = vpop.f32.mrb[0].mxu0
        %v1661 = vadd.f32 0.0, %v1660
        %v1662 = vpop.f32.mrb[0].mxu0
        %v1663 = vpop.f32.mrb[0].mxu0
        %v1664 = vadd.f32 0.0, %v1663
        %v1665 = vpop.f32.mrb[0].mxu0
        %1666 = vmatprep.mubr.bf16.mxu0 %v1589
        %1667 = vmatmul.mubr.bf16.gmra.mrb[0].mxu0 %v1588
        %v1668 = vpop.f32.mrb[0].mxu0
        %v1669 = vadd.f32 0.0, %v1668
        %v1670 = vpop.f32.mrb[0].mxu0
        %v1671 = vpop.f32.mrb[0].mxu0
        %v1672 = vadd.f32 0.0, %v1671
        %v1673 = vpop.f32.mrb[0].mxu0
        %1674 = vmatprep.mubr.bf16.mxu0 %v1591
        %1675 = vmatmul.mubr.bf16.gmra.mrb[0].mxu0 %v1590
        %v1676 = vpop.f32.mrb[0].mxu0
        %v1677 = vadd.f32 0.0, %v1676
        %v1678 = vpop.f32.mrb[0].mxu0
        %v1679 = vpop.f32.mrb[0].mxu0
        %v1680 = vadd.f32 0.0, %v1679
        %v1681 = vpop.f32.mrb[0].mxu0
        %1682 = vmatprep.mubr.bf16.mxu0 %v1593
        %1683 = vmatmul.mubr.bf16.gmra.mrb[0].mxu0 %v1592
        %v1684 = vpop.f32.mrb[0].mxu0
        %v1685 = vadd.f32 0.0, %v1684
        %v1686 = vpop.f32.mrb[0].mxu0
        %v1687 = vpop.f32.mrb[0].mxu0
        %v1688 = vadd.f32 0.0, %v1687
        %v1689 = vpop.f32.mrb[0].mxu0
        %1690 = vdwg.mxu0
        %v1691 = vadd.f32 %v1562, %v1629
        %v1692 = vadd.f32 %v1563, %v1632
        %v1693 = vadd.f32 %v1564, %v1637
        %v1694 = vadd.f32 %v1565, %v1640
        %v1695 = vadd.f32 %v1566, %v1645
        %v1696 = vadd.f32 %v1567, %v1648
        %v1697 = vadd.f32 %v1568, %v1653
        %v1698 = vadd.f32 %v1569, %v1656
        %v1699 = vadd.f32 %v1570, %v1661
        %v1700 = vadd.f32 %v1571, %v1664
        %v1701 = vadd.f32 %v1572, %v1669
        %v1702 = vadd.f32 %v1573, %v1672
        %v1703 = vadd.f32 %v1574, %v1677
        %v1704 = vadd.f32 %v1575, %v1680
        %v1705 = vadd.f32 %v1576, %v1685
        %v1706 = vadd.f32 %v1577, %v1688
        %1707 = vst.msk [vmem:[#allocation5] sm:$0xff] %vm655, %v1691
        %1708 = vst.msk [vmem:[#allocation5 + $0x8] sm:$0xff] %vm655, %v1692
        %1709 = vst.msk [vmem:[#allocation5 + $0x10] sm:$0xff] %vm655, %v1693
        %1710 = vst.msk [vmem:[#allocation5 + $0x18] sm:$0xff] %vm655, %v1694
        %1711 = vst.msk [vmem:[#allocation5 + $0x20] sm:$0xff] %vm655, %v1695
        %1712 = vst.msk [vmem:[#allocation5 + $0x28] sm:$0xff] %vm655, %v1696
        %1713 = vst.msk [vmem:[#allocation5 + $0x30] sm:$0xff] %vm655, %v1697
        %1714 = vst.msk [vmem:[#allocation5 + $0x38] sm:$0xff] %vm655, %v1698
        %1715 = vst.msk [vmem:[#allocation5 + $0x40] sm:$0xff] %vm655, %v1699
        %1716 = vst.msk [vmem:[#allocation5 + $0x48] sm:$0xff] %vm655, %v1700
        %1717 = vst.msk [vmem:[#allocation5 + $0x50] sm:$0xff] %vm655, %v1701
        %1718 = vst.msk [vmem:[#allocation5 + $0x58] sm:$0xff] %vm655, %v1702
        %1719 = vst.msk [vmem:[#allocation5 + $0x60] sm:$0xff] %vm655, %v1703
        %1720 = vst.msk [vmem:[#allocation5 + $0x68] sm:$0xff] %vm655, %v1704
        %1721 = vst.msk [vmem:[#allocation5 + $0x70] sm:$0xff] %vm655, %v1705
        %1722 = vst.msk [vmem:[#allocation5 + $0x78] sm:$0xff] %vm655, %v1706
        %1723 = vst.msk [vmem:[#allocation3] sm:$0xff] %vm1449, %v1113
        %1724 = vst.msk [vmem:[#allocation3 + $0x8] sm:$0xff] %vm1449, %v1114
        %1725 = vst.msk [vmem:[#allocation3 + $0x10] sm:$0xff] %vm1449, %v1115
        %1726 = vst.msk [vmem:[#allocation3 + $0x18] sm:$0xff] %vm1449, %v1116
        %1727 = vst.msk [vmem:[#allocation3 + $0x20] sm:$0xff] %vm1449, %v1117
        %1728 = vst.msk [vmem:[#allocation3 + $0x28] sm:$0xff] %vm1449, %v1118
        %1729 = vst.msk [vmem:[#allocation3 + $0x30] sm:$0xff] %vm1449, %v1119
        %1730 = vst.msk [vmem:[#allocation3 + $0x38] sm:$0xff] %vm1449, %v1120
        %1731 = vst.msk [vmem:[#allocation3 + $0x40] sm:$0xff] %vm1449, %v1121
        %1732 = vst.msk [vmem:[#allocation3 + $0x48] sm:$0xff] %vm1449, %v1122
        %1733 = vst.msk [vmem:[#allocation3 + $0x50] sm:$0xff] %vm1449, %v1123
        %1734 = vst.msk [vmem:[#allocation3 + $0x58] sm:$0xff] %vm1449, %v1124
        %1735 = vst.msk [vmem:[#allocation3 + $0x60] sm:$0xff] %vm1449, %v1125
        %1736 = vst.msk [vmem:[#allocation3 + $0x68] sm:$0xff] %vm1449, %v1126
        %1737 = vst.msk [vmem:[#allocation3 + $0x70] sm:$0xff] %vm1449, %v1127
        %1738 = vst.msk [vmem:[#allocation3 + $0x78] sm:$0xff] %vm1449, %v1128
      $region44: #{tpu_custom_call.1} parent=35 // pred_fallthru
        _
      // Predicated region
      $region45: #{tpu_custom_call.1} parent=35 // pred_check
        %p1739 = pneg %p435
      $region46: #{tpu_custom_call.1} parent=35 // pred_check_branch
        %1741 = sbr.rel (%p1739) target = $region48
      $region47: #{tpu_custom_call.1} parent=35 // pred_region
        %v1742 = vld [vmem:[#allocation4] sm:$0xff]
        %v1743 = vld [vmem:[#allocation4 + $0x8] sm:$0xff]
        %v1744 = vld [vmem:[#allocation4 + $0x10] sm:$0xff]
        %v1745 = vld [vmem:[#allocation4 + $0x18] sm:$0xff]
        %v1746 = vld [vmem:[#allocation4 + $0x20] sm:$0xff]
        %v1747 = vld [vmem:[#allocation4 + $0x28] sm:$0xff]
        %v1748 = vld [vmem:[#allocation4 + $0x30] sm:$0xff]
        %v1749 = vld [vmem:[#allocation4 + $0x38] sm:$0xff]
        %v1750 = vld [vmem:[#allocation4 + $0x40] sm:$0xff]
        %v1751 = vld [vmem:[#allocation4 + $0x48] sm:$0xff]
        %v1752 = vld [vmem:[#allocation4 + $0x50] sm:$0xff]
        %v1753 = vld [vmem:[#allocation4 + $0x58] sm:$0xff]
        %v1754 = vld [vmem:[#allocation4 + $0x60] sm:$0xff]
        %v1755 = vld [vmem:[#allocation4 + $0x68] sm:$0xff]
        %v1756 = vld [vmem:[#allocation4 + $0x70] sm:$0xff]
        %v1757 = vld [vmem:[#allocation4 + $0x78] sm:$0xff]
        %vm1758 = vcmp.eq.f32.partialorder %v1742, 0.0
        %vm1759 = vcmp.eq.f32.partialorder %v1743, 0.0
        %vm1760 = vcmp.eq.f32.partialorder %v1744, 0.0
        %vm1761 = vcmp.eq.f32.partialorder %v1745, 0.0
        %vm1762 = vcmp.eq.f32.partialorder %v1746, 0.0
        %vm1763 = vcmp.eq.f32.partialorder %v1747, 0.0
        %vm1764 = vcmp.eq.f32.partialorder %v1748, 0.0
        %vm1765 = vcmp.eq.f32.partialorder %v1749, 0.0
        %vm1766 = vcmp.eq.f32.partialorder %v1750, 0.0
        %vm1767 = vcmp.eq.f32.partialorder %v1751, 0.0
        %vm1768 = vcmp.eq.f32.partialorder %v1752, 0.0
        %vm1769 = vcmp.eq.f32.partialorder %v1753, 0.0
        %vm1770 = vcmp.eq.f32.partialorder %v1754, 0.0
        %vm1771 = vcmp.eq.f32.partialorder %v1755, 0.0
        %vm1772 = vcmp.eq.f32.partialorder %v1756, 0.0
        %vm1773 = vcmp.eq.f32.partialorder %v1757, 0.0
        %v1774 = vsel %vm1758, 1.0, %v1742
        %v1775 = vsel %vm1759, 1.0, %v1743
        %v1776 = vsel %vm1760, 1.0, %v1744
        %v1777 = vsel %vm1761, 1.0, %v1745
        %v1778 = vsel %vm1762, 1.0, %v1746
        %v1779 = vsel %vm1763, 1.0, %v1747
        %v1780 = vsel %vm1764, 1.0, %v1748
        %v1781 = vsel %vm1765, 1.0, %v1749
        %v1782 = vsel %vm1766, 1.0, %v1750
        %v1783 = vsel %vm1767, 1.0, %v1751
        %v1784 = vsel %vm1768, 1.0, %v1752
        %v1785 = vsel %vm1769, 1.0, %v1753
        %v1786 = vsel %vm1770, 1.0, %v1754
        %v1787 = vsel %vm1771, 1.0, %v1755
        %v1788 = vsel %vm1772, 1.0, %v1756
        %v1789 = vsel %vm1773, 1.0, %v1757
        %v1790 = vld [vmem:[#allocation5] sm:$0xff]
        %v1791 = vld [vmem:[#allocation5 + $0x8] sm:$0xff]
        %v1792 = vld [vmem:[#allocation5 + $0x10] sm:$0xff]
        %v1793 = vld [vmem:[#allocation5 + $0x18] sm:$0xff]
        %v1794 = vld [vmem:[#allocation5 + $0x20] sm:$0xff]
        %v1795 = vld [vmem:[#allocation5 + $0x28] sm:$0xff]
        %v1796 = vld [vmem:[#allocation5 + $0x30] sm:$0xff]
        %v1797 = vld [vmem:[#allocation5 + $0x38] sm:$0xff]
        %v1798 = vld [vmem:[#allocation5 + $0x40] sm:$0xff]
        %v1799 = vld [vmem:[#allocation5 + $0x48] sm:$0xff]
        %v1800 = vld [vmem:[#allocation5 + $0x50] sm:$0xff]
        %v1801 = vld [vmem:[#allocation5 + $0x58] sm:$0xff]
        %v1802 = vld [vmem:[#allocation5 + $0x60] sm:$0xff]
        %v1803 = vld [vmem:[#allocation5 + $0x68] sm:$0xff]
        %v1804 = vld [vmem:[#allocation5 + $0x70] sm:$0xff]
        %v1805 = vld [vmem:[#allocation5 + $0x78] sm:$0xff]
        %v1806 = vrcp.pop %v1774
        %v1807 = vrcp.pop %v1775
        %v1808 = vrcp.pop %v1776
        %v1809 = vrcp.pop %v1777
        %v1810 = vrcp.pop %v1778
        %v1811 = vrcp.pop %v1779
        %v1812 = vrcp.pop %v1780
        %v1813 = vrcp.pop %v1781
        %v1814 = vrcp.pop %v1782
        %v1815 = vrcp.pop %v1783
        %v1816 = vrcp.pop %v1784
        %v1817 = vrcp.pop %v1785
        %v1818 = vrcp.pop %v1786
        %v1819 = vrcp.pop %v1787
        %v1820 = vrcp.pop %v1788
        %v1821 = vrcp.pop %v1789
        %1823 = vset.pattern.permute.xlu0 0
        %1824 = vperm.xlu0 %1823, %v1806
        %v1825 = vpop.permute.xlu0 %1824
        %1828 = vset.pattern.permute.xlu0 0
        %1829 = vperm.xlu0 %1828, %v1807
        %v1830 = vpop.permute.xlu0 %1829
        %1833 = vset.pattern.permute.xlu0 0
        %1834 = vperm.xlu0 %1833, %v1808
        %v1835 = vpop.permute.xlu0 %1834
        %1838 = vset.pattern.permute.xlu0 0
        %1839 = vperm.xlu0 %1838, %v1809
        %v1840 = vpop.permute.xlu0 %1839
        %1843 = vset.pattern.permute.xlu0 0
        %1844 = vperm.xlu0 %1843, %v1810
        %v1845 = vpop.permute.xlu0 %1844
        %1848 = vset.pattern.permute.xlu0 0
        %1849 = vperm.xlu0 %1848, %v1811
        %v1850 = vpop.permute.xlu0 %1849
        %1853 = vset.pattern.permute.xlu0 0
        %1854 = vperm.xlu0 %1853, %v1812
        %v1855 = vpop.permute.xlu0 %1854
        %1858 = vset.pattern.permute.xlu0 0
        %1859 = vperm.xlu0 %1858, %v1813
        %v1860 = vpop.permute.xlu0 %1859
        %1863 = vset.pattern.permute.xlu0 0
        %1864 = vperm.xlu0 %1863, %v1814
        %v1865 = vpop.permute.xlu0 %1864
        %1868 = vset.pattern.permute.xlu0 0
        %1869 = vperm.xlu0 %1868, %v1815
        %v1870 = vpop.permute.xlu0 %1869
        %1873 = vset.pattern.permute.xlu0 0
        %1874 = vperm.xlu0 %1873, %v1816
        %v1875 = vpop.permute.xlu0 %1874
        %1878 = vset.pattern.permute.xlu0 0
        %1879 = vperm.xlu0 %1878, %v1817
        %v1880 = vpop.permute.xlu0 %1879
        %1883 = vset.pattern.permute.xlu0 0
        %1884 = vperm.xlu0 %1883, %v1818
        %v1885 = vpop.permute.xlu0 %1884
        %1888 = vset.pattern.permute.xlu0 0
        %1889 = vperm.xlu0 %1888, %v1819
        %v1890 = vpop.permute.xlu0 %1889
        %1893 = vset.pattern.permute.xlu0 0
        %1894 = vperm.xlu0 %1893, %v1820
        %v1895 = vpop.permute.xlu0 %1894
        %1898 = vset.pattern.permute.xlu0 0
        %1899 = vperm.xlu0 %1898, %v1821
        %v1900 = vpop.permute.xlu0 %1899
        %v1902 = vmul.f32 %v1790, %v1825
        %v1903 = vmul.f32 %v1791, %v1830
        %v1904 = vmul.f32 %v1792, %v1835
        %v1905 = vmul.f32 %v1793, %v1840
        %v1906 = vmul.f32 %v1794, %v1845
        %v1907 = vmul.f32 %v1795, %v1850
        %v1908 = vmul.f32 %v1796, %v1855
        %v1909 = vmul.f32 %v1797, %v1860
        %v1910 = vmul.f32 %v1798, %v1865
        %v1911 = vmul.f32 %v1799, %v1870
        %v1912 = vmul.f32 %v1800, %v1875
        %v1913 = vmul.f32 %v1801, %v1880
        %v1914 = vmul.f32 %v1802, %v1885
        %v1915 = vmul.f32 %v1803, %v1890
        %v1916 = vmul.f32 %v1804, %v1895
        %v1917 = vmul.f32 %v1805, %v1900
        %vm1918 = vcmask 261120
        %1919 = vst.msk [vmem:[%s430] sm:$0xff] %vm1918, %v1902
        %1920 = vst.msk [vmem:[%s430 + $0x8] sm:$0xff] %vm1918, %v1903
        %1921 = vst.msk [vmem:[%s430 + $0x10] sm:$0xff] %vm1918, %v1904
        %1922 = vst.msk [vmem:[%s430 + $0x18] sm:$0xff] %vm1918, %v1905
        %1923 = vst.msk [vmem:[%s430 + $0x20] sm:$0xff] %vm1918, %v1906
        %1924 = vst.msk [vmem:[%s430 + $0x28] sm:$0xff] %vm1918, %v1907
        %1925 = vst.msk [vmem:[%s430 + $0x30] sm:$0xff] %vm1918, %v1908
        %1926 = vst.msk [vmem:[%s430 + $0x38] sm:$0xff] %vm1918, %v1909
        %1927 = vst.msk [vmem:[%s430 + $0x40] sm:$0xff] %vm1918, %v1910
        %1928 = vst.msk [vmem:[%s430 + $0x48] sm:$0xff] %vm1918, %v1911
        %1929 = vst.msk [vmem:[%s430 + $0x50] sm:$0xff] %vm1918, %v1912
        %1930 = vst.msk [vmem:[%s430 + $0x58] sm:$0xff] %vm1918, %v1913
        %1931 = vst.msk [vmem:[%s430 + $0x60] sm:$0xff] %vm1918, %v1914
        %1932 = vst.msk [vmem:[%s430 + $0x68] sm:$0xff] %vm1918, %v1915
        %1933 = vst.msk [vmem:[%s430 + $0x70] sm:$0xff] %vm1918, %v1916
        %1934 = vst.msk [vmem:[%s430 + $0x78] sm:$0xff] %vm1918, %v1917
      $region48: #{tpu_custom_call.1} parent=35 // pred_fallthru
        _
      %s1935 = smul.u32 16, %s33
      %p1936 = scmp.lt.s32.totalorder %s32, 1
      %s1937 = scalar_select %p1936, %s32, 1
      %p1938 = scmp.lt.s32.totalorder %s1935, 31
      %s1939 = scalar_select %p1938, %s1935, 31
      %s1940 = smul.addr %s1937, 32
      %s1941 = sadd.s32 %s1939, %s1940
      %s1942 = smul.addr %s1941, 8
      %s1943 = scalar_lea.vmem %s6, %s1942
      // Predicated region
      $region49: #{tpu_custom_call.1} parent=35 // pred_check
        %p1944 = pneg %p196
      $region50: #{tpu_custom_call.1} parent=35 // pred_check_branch
        %1946 = sbr.rel (%p1944) target = $region52
      $region51: #{tpu_custom_call.1} parent=35 // pred_region
        %s1947 = smul.u32 16, %s33
      $region52: #{tpu_custom_call.1} parent=35 // pred_fallthru
        _
    $region36: #{tpu_custom_call.1} parent=5 // pred_fallthru
      _
    %p1948 = scmp.le.s32.totalorder 2, %s22
    // Predicated region
    $region53: #{tpu_custom_call.1} parent=5 // pred_check
      %p1949 = pneg %p1948
    $region54: #{tpu_custom_call.1} parent=5 // pred_check_branch
      %1951 = sbr.rel (%p1949) target = $region56
    $region55: #{tpu_custom_call.1} parent=5 // pred_region
      %s1952 = ssub.s32 %s22, 2
      // Predicated region
      $region57: #{tpu_custom_call.1} parent=55 // pred_check
        %p1953 = pneg %p202
      $region58: #{tpu_custom_call.1} parent=55 // pred_check_branch
        %1955 = sbr.rel (%p1953) target = $region60
      $region59: #{tpu_custom_call.1} parent=55 // pred_region
        %s1956 = smul.u32 16, %s36
        %p1957 = scmp.lt.s32.totalorder %s35, 1
        %s1958 = scalar_select %p1957, %s35, 1
        %p1959 = scmp.lt.s32.totalorder %s1956, 31
        %s1960 = scalar_select %p1959, %s1956, 31
        %s1961 = smul.addr %s1958, 32
        %s1962 = sadd.s32 %s1960, %s1961
        %s1963 = smul.addr %s1962, 8
        %s1964 = scalar_lea.vmem %s6, %s1963
      $region60: #{tpu_custom_call.1} parent=55 // pred_fallthru
        _
    $region56: #{tpu_custom_call.1} parent=5 // pred_fallthru
      _
  $region6: #{tpu_custom_call.1} parent=0 // loop_footer
    %s26 = sadd.s32 1, %s22
  $region7: #{tpu_custom_call.1} parent=0 // loop_footer_branch
    %21 = sbr.rel target = $region3
  $region8: #{tpu_custom_call.1} parent=0 // loop_exit
    _

</llo_original>
